<compile_context>
chip_gen: v5e
topology: v5e:2x2
jax: 0.10.0
libtpu: 0.0.40
codegen_flags: <defaults>
</compile_context>

<pallas_src>
import functools
import math

import jax
import jax.numpy as jnp
from jax.experimental import pallas as pl
from jax.experimental.pallas import tpu as pltpu


def _round_up(x, m):
    return (x + m - 1) // m * m


def _cdiv(a, b):
    return (a + b - 1) // b


# ---------------------------------------------------------------------------
# Kernel body (one "side": user or item).
# ---------------------------------------------------------------------------

def _dgcn_side_kernel(alpha, tk, n_k_self, n_k_cross, rem_self, rem_cross,
                      adj_self_ref, adj_cross_ref,
                      fea_self_src_ref, fea_other_src_ref, fea_self_dst_ref,
                      w_self_ref, b_self_ref, w_cross_ref, b_cross_ref,
                      w_a_ref, w_b_ref, w_fea_ref, b_fused_ref,
                      out_ref, acc_self_ref, acc_cross_ref):
    k = pl.program_id(1)

    @pl.when(k == 0)
    def _():
        acc_self_ref[...] = jnp.zeros_like(acc_self_ref)
        acc_cross_ref[...] = jnp.zeros_like(acc_cross_ref)

    # Reduction over source nodes: accumulate adj_tile @ fea_tile (bf16 MXU, f32 acc).
    # (adj @ (fea @ W)) is reassociated to ((adj @ fea) @ W) so the FxF weight multiply
    # happens once per row tile in the epilogue, not once per reduction step.
    def accumulate(adj_ref, fea_ref, acc_ref, n_k_side, rem):
        def step(mask_tail):
            a = adj_ref[...].astype(jnp.bfloat16)
            x = fea_ref[...].astype(jnp.bfloat16)
            if mask_tail:
                # Last reduction tile is ragged: zero both the out-of-range adjacency
                # columns and the out-of-range source-feature rows (uneven Pallas blocks
                # leave unspecified data there).
                col = jax.lax.broadcasted_iota(jnp.int32, a.shape, 1)
                row = jax.lax.broadcasted_iota(jnp.int32, x.shape, 0)
                a = jnp.where(col < rem, a, jnp.zeros_like(a))
                x = jnp.where(row < rem, x, jnp.zeros_like(x))
            acc_ref[...] += jnp.dot(a, x, preferred_element_type=jnp.float32)

        if rem == tk:  # reduction extent divides tk: every in-range step is a full tile
            @pl.when(k < n_k_side)
            def _():
                step(False)
        else:
            @pl.when(k < n_k_side - 1)
            def _():
                step(False)

            @pl.when(k == n_k_side - 1)
            def _():
                step(True)

    accumulate(adj_self_ref, fea_self_src_ref, acc_self_ref, n_k_self, rem_self)
    accumulate(adj_cross_ref, fea_other_src_ref, acc_cross_ref, n_k_cross, rem_cross)

    @pl.when(k == pl.num_programs(1) - 1)
    def _():
        def lrelu(x):
            return jnp.where(x > 0, x, alpha * x)

        # TODO(synk): F.dropout inside GCN is identity at inference and is omitted here.
        ho = lrelu(jnp.dot(acc_self_ref[...].astype(jnp.bfloat16), w_self_ref[...],
                           preferred_element_type=jnp.float32) + b_self_ref[...])
        ho1 = lrelu(jnp.dot(acc_cross_ref[...].astype(jnp.bfloat16), w_cross_ref[...],
                            preferred_element_type=jnp.float32) + b_cross_ref[...])
        # Fused union1 + union (single affine map, precomputed bf16 weights, f32 bias).
        u = (jnp.dot(ho.astype(jnp.bfloat16), w_a_ref[...],
                     preferred_element_type=jnp.float32)
             + jnp.dot(ho1.astype(jnp.bfloat16), w_b_ref[...],
                       preferred_element_type=jnp.float32)
             + jnp.dot(fea_self_dst_ref[...].astype(jnp.bfloat16), w_fea_ref[...],
                       preferred_element_type=jnp.float32)
             + b_fused_ref[...])
        out_ref[...] = lrelu(u).astype(out_ref.dtype)


# ---------------------------------------------------------------------------
# Per-side wrapper: tiling, BlockSpecs, grid. No O(N^2) copies are made here.
# ---------------------------------------------------------------------------

def _dgcn_side(fea_self, fea_other, adj_self, adj_cross, side_params, alpha,
               *, tm=512, tk=1024, out_dtype=jnp.float32):
    n_dst, f = fea_self.shape
    n_src_self = adj_self.shape[1]     # source extent of the self graph (== n_dst)
    n_src_cross = adj_cross.shape[1]   # source extent of the cross graph
    assert adj_self.shape[0] == n_dst and adj_cross.shape[0] == n_dst
    assert fea_other.shape == (n_src_cross, f) and n_src_self == n_dst

    # Row tile: keep >= 2 row tiles when possible (both TensorCores busy on megacore
    # parts), rounded to the 8-sublane granule and capped at `tm`.
    tm = max(8, min(tm, _round_up(_cdiv(n_dst, 2), 8)))
    # Reduction tile: lane-granule (128) multiple, capped by the larger source extent.
    tk = min(tk, _round_up(max(n_src_self, n_src_cross), 128))

    n_i = _cdiv(n_dst, tm)
    n_k_self = _cdiv(n_src_self, tk)
    n_k_cross = _cdiv(n_src_cross, tk)
    n_k = max(n_k_self, n_k_cross)
    rem_self = n_src_self - (n_k_self - 1) * tk     # valid cols/rows in the tail tile
    rem_cross = n_src_cross - (n_k_cross - 1) * tk

    p = side_params  # union-fused, weights bf16 / biases f32

    const2 = lambda shape: pl.BlockSpec(shape, lambda i, k: (0, 0))
    in_specs = [
        # adjacencies: (tm, tk) tiles streamed in their native dtype; k clamped so the
        # shorter reduction just re-uses its last (already resident) block while pl.when
        # skips the compute. Ragged tails handled in-kernel (uneven blocks + mask).
        pl.BlockSpec((tm, tk), lambda i, k: (i, jnp.minimum(k, n_k_self - 1))),
        pl.BlockSpec((tm, tk), lambda i, k: (i, jnp.minimum(k, n_k_cross - 1))),
        # source features: (tk, f) tiles along the reduction axis.
        pl.BlockSpec((tk, f), lambda i, k: (jnp.minimum(k, n_k_self - 1), 0)),
        pl.BlockSpec((tk, f), lambda i, k: (jnp.minimum(k, n_k_cross - 1), 0)),
        # destination features for the union term: (tm, f) per row tile (revisited block).
        pl.BlockSpec((tm, f), lambda i, k: (i, 0)),
        # weights / biases: constant index maps -> DMA'd once, VMEM-resident.
        const2((f, f)), const2((1, f)),      # w_self (bf16), b_self (f32)
        const2((f, f)), const2((1, f)),      # w_cross, b_cross
        const2((f, f)), const2((f, f)),      # w_a, w_b (fused union, bf16)
        const2((f, f)), const2((1, f)),      # w_fea (bf16), b_fused (f32)
    ]

    # Derive the VMEM limit from the actual tile footprint (portable across 64/128 MiB
    # parts) instead of hard-coding it.
    bpe = lambda x: jnp.dtype(x.dtype).itemsize
    est = (2 * tm * tk * (bpe(adj_self) + bpe(adj_cross))          # double-buffered adj tiles
           + 2 * tk * f * (bpe(fea_self) + bpe(fea_other))          # src feature tiles
           + 2 * tm * f * bpe(fea_self)                             # dst feature tile
           + 2 * tm * f * jnp.dtype(out_dtype).itemsize             # output tile
           + 2 * tm * f * 4                                         # two f32 accumulators
           + 2 * (5 * f * f * 2 + 3 * f * 4))                       # resident weights/biases
    vmem_limit = int(min(56 * 1024 * 1024, max(32 * 1024 * 1024, 2 * est)))

    out = pl.pallas_call(
        functools.partial(_dgcn_side_kernel, alpha, tk,
                          n_k_self, n_k_cross, rem_self, rem_cross),
        out_shape=jax.ShapeDtypeStruct((n_dst, f), out_dtype),
        grid_spec=pltpu.PrefetchScalarGridSpec(
            num_scalar_prefetch=0,
            grid=(n_i, n_k),
            in_specs=in_specs,
            out_specs=pl.BlockSpec((tm, f), lambda i, k: (i, 0)),
            scratch_shapes=[pltpu.VMEM((tm, f), jnp.float32),
                            pltpu.VMEM((tm, f), jnp.float32)],
        ),
        compiler_params=pltpu.CompilerParams(
            dimension_semantics=("parallel", "arbitrary"),
            vmem_limit_bytes=vmem_limit,
        ),
    )(adj_self, adj_cross, fea_self, fea_other, fea_self,
      p['w_self'], p['b_self'], p['w_cross'], p['b_cross'],
      p['w_a'], p['w_b'], p['w_fea'], p['b_fused'])

    return out


def _prepare_side_params(p):
    """Fold union1->union into a single affine map; weights bf16, biases f32."""
    hp = jax.lax.Precision.HIGHEST
    w_a = jnp.dot(p['w_u1a'], p['w_ua'], precision=hp)
    w_b = jnp.dot(p['w_u1b'], p['w_ua'], precision=hp)
    b_fused = jnp.dot(p['b_u1'], p['w_ua'], precision=hp) + p['b_u']
    bf = lambda w: w.astype(jnp.bfloat16)
    f32 = lambda b: b.astype(jnp.float32)
    return dict(
        w_self=bf(p['w_self']), b_self=f32(p['b_self']),
        w_cross=bf(p['w_cross']), b_cross=f32(p['b_cross']),
        w_a=bf(w_a), w_b=bf(w_b),
        w_fea=bf(p['w_ub']), b_fused=f32(b_fused),
    )


def dgcn_layer(ufea, vfea, UV_adj, VU_adj, uu, vv, params, alpha):
    """Pallas implementation of DGCNLayer.forward."""
    user_p = _prepare_side_params(params['user'])
    item_p = _prepare_side_params(params['item'])
    # Features are small (N x F); cast them once to bf16 so the per-row-tile re-stream in
    # the kernel moves half the bytes. Adjacencies (N^2) are streamed as provided —
    # produce them in bf16 upstream to halve the dominant HBM stream.
    ufea_b = ufea.astype(jnp.bfloat16)
    vfea_b = vfea.astype(jnp.bfloat16)
    # TODO(synk): for very small graphs both sides could be fused into one pallas_call
    # (per-call launch/DMA-warmup overhead dominates below a few thousand nodes).
    user_out = _dgcn_side(ufea_b, vfea_b, uu, UV_adj, user_p, alpha)
    item_out = _dgcn_side(vfea_b, ufea_b, vv, VU_adj, item_p, alpha)
    return user_out, item_out


# ---------------------------------------------------------------------------
# Deterministic parameter construction (mirrors the PyTorch module's shapes).
# ---------------------------------------------------------------------------

def _uniform(key, shape, bound):
    return jax.random.uniform(key, shape, jnp.float32, minval=-bound, maxval=bound)


def _make_gcn(key, nfeat, nhid):
    k1, k2 = jax.random.split(key)
    stdv = 1.0 / math.sqrt(nhid)
    return _uniform(k1, (nfeat, nhid), stdv), _uniform(k2, (1, nhid), stdv)


def _make_linear(key, in_f, out_f):
    k1, k2 = jax.random.split(key)
    bound = 1.0 / math.sqrt(in_f)
    w = _uniform(k1, (out_f, in_f), bound)     # torch layout
    b = _uniform(k2, (1, out_f), bound)
    return w.T, b                              # pre-transpose to (in, out)


def make_params(key, feature_dim, hidden_dim):
    assert feature_dim == hidden_dim, "DGCNLayer forward requires feature_dim == hidden_dim"
    F = feature_dim
    keys = jax.random.split(key, 8)
    w_gc1, b_gc1 = _make_gcn(keys[0], F, F)
    w_gc2, b_gc2 = _make_gcn(keys[1], F, F)
    w_gc3, b_gc3 = _make_gcn(keys[2], F, F)
    w_gc4, b_gc4 = _make_gcn(keys[3], F, F)
    wu1, bu1 = _make_linear(keys[4], 2 * F, F)
    wi1, bi1 = _make_linear(keys[5], 2 * F, F)
    wu, bu = _make_linear(keys[6], 2 * F, F)
    wi, bi = _make_linear(keys[7], 2 * F, F)
    user = dict(w_cross=w_gc3, b_cross=b_gc3, w_self=w_gc1, b_self=b_gc1,
                w_u1a=wu1[:F], w_u1b=wu1[F:], b_u1=bu1,
                w_ua=wu[:F], w_ub=wu[F:], b_u=bu)
    item = dict(w_cross=w_gc4, b_cross=b_gc4, w_self=w_gc2, b_self=b_gc2,
                w_u1a=wi1[:F], w_u1b=wi1[F:], b_u1=bi1,
                w_ua=wi[:F], w_ub=wi[F:], b_u=bi)
    return dict(user=user, item=item)


# ---------------------------------------------------------------------------
# Pure-JAX reference (original unfused module math) for a correctness check.
# ---------------------------------------------------------------------------

def _bf16_round(x):
    return x.astype(jnp.bfloat16).astype(jnp.float32)


def _ref_side(fea_self, fea_other, adj_cross, adj_self, p, alpha):
    hp = jax.lax.Precision.HIGHEST
    lrelu = lambda x: jnp.where(x > 0, x, alpha * x)
    # The kernel works on bf16 features / adjacencies / GCN weights; match that here.
    fs, fo = _bf16_round(fea_self), _bf16_round(fea_other)
    ac, asf = adj_cross.astype(jnp.float32), adj_self.astype(jnp.float32)
    w_cross, w_self = _bf16_round(p['w_cross']), _bf16_round(p['w_self'])
    # Original (unfused) module math: GCN(x, adj) = LeakyReLU(adj @ (x @ W) + b).
    ho1 = lrelu(jnp.dot(ac, jnp.dot(fo, w_cross, precision=hp), precision=hp) + p['b_cross'])
    ho = lrelu(jnp.dot(asf, jnp.dot(fs, w_self, precision=hp), precision=hp) + p['b_self'])
    u1 = jnp.dot(jnp.concatenate([ho, ho1], axis=1),
                 jnp.concatenate([p['w_u1a'], p['w_u1b']], axis=0), precision=hp) + p['b_u1']
    u = jnp.dot(jnp.concatenate([u1, fs], axis=1),
                jnp.concatenate([p['w_ua'], p['w_ub']], axis=0), precision=hp) + p['b_u']
    return lrelu(u)


if __name__ == "__main__":
    key = jax.random.PRNGKey(0)
    n_user, n_item = 48, 40
    feature_dim = hidden_dim = 32
    alpha = 0.2  # opt['leakey']

    k_p, k_u, k_v, k_uv, k_vu, k_uu, k_vv = jax.random.split(key, 7)
    params = make_params(k_p, feature_dim, hidden_dim)

    ufea = jax.random.normal(k_u, (n_user, feature_dim), jnp.float32)
    vfea = jax.random.normal(k_v, (n_item, feature_dim), jnp.float32)
    # Dense row-softmax adjacencies, produced directly in bf16 "upstream" (the cast fuses
    # into the softmax) so the kernel streams the N^2 data at half width with no extra pass.
    UV_adj = jax.nn.softmax(jax.random.normal(k_uv, (n_user, n_item), jnp.float32),
                            axis=1).astype(jnp.bfloat16)
    VU_adj = jax.nn.softmax(jax.random.normal(k_vu, (n_item, n_user), jnp.float32),
                            axis=1).astype(jnp.bfloat16)
    uu = jax.nn.softmax(jax.random.normal(k_uu, (n_user, n_user), jnp.float32),
                        axis=1).astype(jnp.bfloat16)
    vv = jax.nn.softmax(jax.random.normal(k_vv, (n_item, n_item), jnp.float32),
                        axis=1).astype(jnp.bfloat16)

    user_out, item_out = dgcn_layer(ufea, vfea, UV_adj, VU_adj, uu, vv, params, alpha)
    jax.block_until_ready((user_out, item_out))

    user_ref = _ref_side(ufea, vfea, UV_adj, uu, params['user'], alpha)
    item_ref = _ref_side(vfea, ufea, VU_adj, vv, params['item'], alpha)
    assert user_out.shape == (n_user, feature_dim) and item_out.shape == (n_item, feature_dim)
    assert jnp.allclose(user_out, user_ref, atol=1e-2, rtol=1e-2), \
        float(jnp.max(jnp.abs(user_out - user_ref)))
    assert jnp.allclose(item_out, item_ref, atol=1e-2, rtol=1e-2), \
        float(jnp.max(jnp.abs(item_out - item_ref)))

    print("KERNEL_OK")
</pallas_src>

<mosaic_0001>
module attributes {stable_mosaic.version = 11 : i64} {
  func.func @_dgcn_side_kernel(%arg0: i32, %arg1: i32, %arg2: memref<24x128xbf16, #tpu.memory_space<vmem>>, %arg3: memref<24x128xbf16, #tpu.memory_space<vmem>>, %arg4: memref<128x32xbf16, #tpu.memory_space<vmem>>, %arg5: memref<128x32xbf16, #tpu.memory_space<vmem>>, %arg6: memref<24x32xbf16, #tpu.memory_space<vmem>>, %arg7: memref<32x32xbf16, #tpu.memory_space<vmem>>, %arg8: memref<1x32xf32, #tpu.memory_space<vmem>>, %arg9: memref<32x32xbf16, #tpu.memory_space<vmem>>, %arg10: memref<1x32xf32, #tpu.memory_space<vmem>>, %arg11: memref<32x32xbf16, #tpu.memory_space<vmem>>, %arg12: memref<32x32xbf16, #tpu.memory_space<vmem>>, %arg13: memref<32x32xbf16, #tpu.memory_space<vmem>>, %arg14: memref<1x32xf32, #tpu.memory_space<vmem>>, %arg15: memref<24x32xf32, #tpu.memory_space<vmem>>, %arg16: memref<24x32xf32, #tpu.memory_space<vmem>>, %arg17: memref<24x32xf32, #tpu.memory_space<vmem>>) attributes {dimension_semantics = [#tpu.dimension_semantics<parallel>, #tpu.dimension_semantics<arbitrary>], iteration_bounds = array<i64: 2, 1>, scalar_prefetch = 0 : i64, scratch_operands = 2 : i64, tpu.core_type = #tpu.core_type<tc>, window_params = [{transform_indices = @transform_0, window_bounds = array<i64: 24, 128>}, {transform_indices = @transform_1, window_bounds = array<i64: 24, 128>}, {transform_indices = @transform_2, window_bounds = array<i64: 128, 32>}, {transform_indices = @transform_3, window_bounds = array<i64: 128, 32>}, {transform_indices = @transform_4, window_bounds = array<i64: 24, 32>}, {pipeline_mode = #tpu.pipeline_mode<synchronous>, transform_indices = @transform_5, window_bounds = array<i64: 32, 32>}, {pipeline_mode = #tpu.pipeline_mode<synchronous>, transform_indices = @transform_6, window_bounds = array<i64: 1, 32>}, {pipeline_mode = #tpu.pipeline_mode<synchronous>, transform_indices = @transform_7, window_bounds = array<i64: 32, 32>}, {pipeline_mode = #tpu.pipeline_mode<synchronous>, transform_indices = @transform_8, window_bounds = array<i64: 1, 32>}, {pipeline_mode = #tpu.pipeline_mode<synchronous>, transform_indices = @transform_9, window_bounds = array<i64: 32, 32>}, {pipeline_mode = #tpu.pipeline_mode<synchronous>, transform_indices = @transform_10, window_bounds = array<i64: 32, 32>}, {pipeline_mode = #tpu.pipeline_mode<synchronous>, transform_indices = @transform_11, window_bounds = array<i64: 32, 32>}, {pipeline_mode = #tpu.pipeline_mode<synchronous>, transform_indices = @transform_12, window_bounds = array<i64: 1, 32>}, {transform_indices = @transform_13, window_bounds = array<i64: 24, 32>}]} {
    %c0_i32 = arith.constant 0 : i32
    %0 = arith.cmpi eq, %arg1, %c0_i32 : i32
    %1 = arith.extui %0 : i1 to i32
    %c0_i32_0 = arith.constant 0 : i32
    %2 = arith.cmpi ne, %1, %c0_i32_0 : i32
    scf.if %2 {
      %cst = arith.constant 0.000000e+00 : f32
      %18 = vector.broadcast %cst : f32 to vector<24x32xf32>
      %c0 = arith.constant 0 : index
      %c0_11 = arith.constant 0 : index
      %19 = vector.load %arg16[%c0, %c0_11] : memref<24x32xf32, #tpu.memory_space<vmem>>, vector<24x32xf32>
      tpu.vector_store %arg16[%c0, %c0_11], %18 {strides = array<i32>} : memref<24x32xf32, #tpu.memory_space<vmem>>, vector<24x32xf32>,
      %cst_12 = arith.constant 0.000000e+00 : f32
      %20 = vector.broadcast %cst_12 : f32 to vector<24x32xf32>
      %c0_13 = arith.constant 0 : index
      %c0_14 = arith.constant 0 : index
      %21 = vector.load %arg17[%c0_13, %c0_14] : memref<24x32xf32, #tpu.memory_space<vmem>>, vector<24x32xf32>
      tpu.vector_store %arg17[%c0_13, %c0_14], %20 {strides = array<i32>} : memref<24x32xf32, #tpu.memory_space<vmem>>, vector<24x32xf32>,
    } else {
    }
    %c0_i32_1 = arith.constant 0 : i32
    %3 = arith.cmpi slt, %arg1, %c0_i32_1 : i32
    %4 = arith.extui %3 : i1 to i32
    %c0_i32_2 = arith.constant 0 : i32
    %5 = arith.cmpi ne, %4, %c0_i32_2 : i32
    scf.if %5 {
      %c0 = arith.constant 0 : index
      %c0_11 = arith.constant 0 : index
      %18 = vector.load %arg2[%c0, %c0_11] : memref<24x128xbf16, #tpu.memory_space<vmem>>, vector<24x128xbf16>
      %c0_12 = arith.constant 0 : index
      %c0_13 = arith.constant 0 : index
      %19 = vector.load %arg4[%c0_12, %c0_13] : memref<128x32xbf16, #tpu.memory_space<vmem>>, vector<128x32xbf16>
      %c0_14 = arith.constant 0 : index
      %c0_15 = arith.constant 0 : index
      %20 = vector.load %arg16[%c0_14, %c0_15] : memref<24x32xf32, #tpu.memory_space<vmem>>, vector<24x32xf32>
      %cst = arith.constant dense<0.000000e+00> : vector<24x32xf32>
      %21 = tpu.matmul %18, %19, %cst {dimension_numbers = #tpu.dot_dimension_numbers<[1], [0], [0], [1], [0, 0, 1, 1], [], []>} : vector<24x128xbf16>, vector<128x32xbf16>, vector<24x32xf32> -> vector<24x32xf32>
      %22 = arith.addf %20, %21 : vector<24x32xf32>
      %c0_16 = arith.constant 0 : index
      %c0_17 = arith.constant 0 : index
      %23 = vector.load %arg16[%c0_16, %c0_17] : memref<24x32xf32, #tpu.memory_space<vmem>>, vector<24x32xf32>
      tpu.vector_store %arg16[%c0_16, %c0_17], %22 {strides = array<i32>} : memref<24x32xf32, #tpu.memory_space<vmem>>, vector<24x32xf32>,
    } else {
    }
    %c0_i32_3 = arith.constant 0 : i32
    %6 = arith.cmpi eq, %arg1, %c0_i32_3 : i32
    %7 = arith.extui %6 : i1 to i32
    %c0_i32_4 = arith.constant 0 : i32
    %8 = arith.cmpi ne, %7, %c0_i32_4 : i32
    scf.if %8 {
      %c0 = arith.constant 0 : index
      %c0_11 = arith.constant 0 : index
      %18 = vector.load %arg2[%c0, %c0_11] : memref<24x128xbf16, #tpu.memory_space<vmem>>, vector<24x128xbf16>
      %c0_12 = arith.constant 0 : index
      %c0_13 = arith.constant 0 : index
      %19 = vector.load %arg4[%c0_12, %c0_13] : memref<128x32xbf16, #tpu.memory_space<vmem>>, vector<128x32xbf16>
      %20 = tpu.iota {dimensions = array<i32: 1>} : vector<24x128xi32>
      %21 = tpu.iota {dimensions = array<i32: 0>} : vector<128x32xi32>
      %c48_i32 = arith.constant 48 : i32
      %22 = vector.broadcast %c48_i32 : i32 to vector<24x128xi32>
      %23 = arith.cmpi slt, %20, %22 : vector<24x128xi32>
      %cst = arith.constant 0.000000e+00 : bf16
      %24 = vector.broadcast %cst : bf16 to vector<24x128xbf16>
      %25 = arith.select %23, %18, %24 : vector<24x128xi1>, vector<24x128xbf16>
      %c48_i32_14 = arith.constant 48 : i32
      %26 = vector.broadcast %c48_i32_14 : i32 to vector<128x32xi32>
      %27 = arith.cmpi slt, %21, %26 : vector<128x32xi32>
      %cst_15 = arith.constant 0.000000e+00 : bf16
      %28 = vector.broadcast %cst_15 : bf16 to vector<128x32xbf16>
      %29 = arith.select %27, %19, %28 : vector<128x32xi1>, vector<128x32xbf16>
      %c0_16 = arith.constant 0 : index
      %c0_17 = arith.constant 0 : index
      %30 = vector.load %arg16[%c0_16, %c0_17] : memref<24x32xf32, #tpu.memory_space<vmem>>, vector<24x32xf32>
      %cst_18 = arith.constant dense<0.000000e+00> : vector<24x32xf32>
      %31 = tpu.matmul %25, %29, %cst_18 {dimension_numbers = #tpu.dot_dimension_numbers<[1], [0], [0], [1], [0, 0, 1, 1], [], []>} : vector<24x128xbf16>, vector<128x32xbf16>, vector<24x32xf32> -> vector<24x32xf32>
      %32 = arith.addf %30, %31 : vector<24x32xf32>
      %c0_19 = arith.constant 0 : index
      %c0_20 = arith.constant 0 : index
      %33 = vector.load %arg16[%c0_19, %c0_20] : memref<24x32xf32, #tpu.memory_space<vmem>>, vector<24x32xf32>
      tpu.vector_store %arg16[%c0_19, %c0_20], %32 {strides = array<i32>} : memref<24x32xf32, #tpu.memory_space<vmem>>, vector<24x32xf32>,
    } else {
    }
    %c0_i32_5 = arith.constant 0 : i32
    %9 = arith.cmpi slt, %arg1, %c0_i32_5 : i32
    %10 = arith.extui %9 : i1 to i32
    %c0_i32_6 = arith.constant 0 : i32
    %11 = arith.cmpi ne, %10, %c0_i32_6 : i32
    scf.if %11 {
      %c0 = arith.constant 0 : index
      %c0_11 = arith.constant 0 : index
      %18 = vector.load %arg3[%c0, %c0_11] : memref<24x128xbf16, #tpu.memory_space<vmem>>, vector<24x128xbf16>
      %c0_12 = arith.constant 0 : index
      %c0_13 = arith.constant 0 : index
      %19 = vector.load %arg5[%c0_12, %c0_13] : memref<128x32xbf16, #tpu.memory_space<vmem>>, vector<128x32xbf16>
      %c0_14 = arith.constant 0 : index
      %c0_15 = arith.constant 0 : index
      %20 = vector.load %arg17[%c0_14, %c0_15] : memref<24x32xf32, #tpu.memory_space<vmem>>, vector<24x32xf32>
      %cst = arith.constant dense<0.000000e+00> : vector<24x32xf32>
      %21 = tpu.matmul %18, %19, %cst {dimension_numbers = #tpu.dot_dimension_numbers<[1], [0], [0], [1], [0, 0, 1, 1], [], []>} : vector<24x128xbf16>, vector<128x32xbf16>, vector<24x32xf32> -> vector<24x32xf32>
      %22 = arith.addf %20, %21 : vector<24x32xf32>
      %c0_16 = arith.constant 0 : index
      %c0_17 = arith.constant 0 : index
      %23 = vector.load %arg17[%c0_16, %c0_17] : memref<24x32xf32, #tpu.memory_space<vmem>>, vector<24x32xf32>
      tpu.vector_store %arg17[%c0_16, %c0_17], %22 {strides = array<i32>} : memref<24x32xf32, #tpu.memory_space<vmem>>, vector<24x32xf32>,
    } else {
    }
    %c0_i32_7 = arith.constant 0 : i32
    %12 = arith.cmpi eq, %arg1, %c0_i32_7 : i32
    %13 = arith.extui %12 : i1 to i32
    %c0_i32_8 = arith.constant 0 : i32
    %14 = arith.cmpi ne, %13, %c0_i32_8 : i32
    scf.if %14 {
      %c0 = arith.constant 0 : index
      %c0_11 = arith.constant 0 : index
      %18 = vector.load %arg3[%c0, %c0_11] : memref<24x128xbf16, #tpu.memory_space<vmem>>, vector<24x128xbf16>
      %c0_12 = arith.constant 0 : index
      %c0_13 = arith.constant 0 : index
      %19 = vector.load %arg5[%c0_12, %c0_13] : memref<128x32xbf16, #tpu.memory_space<vmem>>, vector<128x32xbf16>
      %20 = tpu.iota {dimensions = array<i32: 1>} : vector<24x128xi32>
      %21 = tpu.iota {dimensions = array<i32: 0>} : vector<128x32xi32>
      %c40_i32 = arith.constant 40 : i32
      %22 = vector.broadcast %c40_i32 : i32 to vector<24x128xi32>
      %23 = arith.cmpi slt, %20, %22 : vector<24x128xi32>
      %cst = arith.constant 0.000000e+00 : bf16
      %24 = vector.broadcast %cst : bf16 to vector<24x128xbf16>
      %25 = arith.select %23, %18, %24 : vector<24x128xi1>, vector<24x128xbf16>
      %c40_i32_14 = arith.constant 40 : i32
      %26 = vector.broadcast %c40_i32_14 : i32 to vector<128x32xi32>
      %27 = arith.cmpi slt, %21, %26 : vector<128x32xi32>
      %cst_15 = arith.constant 0.000000e+00 : bf16
      %28 = vector.broadcast %cst_15 : bf16 to vector<128x32xbf16>
      %29 = arith.select %27, %19, %28 : vector<128x32xi1>, vector<128x32xbf16>
      %c0_16 = arith.constant 0 : index
      %c0_17 = arith.constant 0 : index
      %30 = vector.load %arg17[%c0_16, %c0_17] : memref<24x32xf32, #tpu.memory_space<vmem>>, vector<24x32xf32>
      %cst_18 = arith.constant dense<0.000000e+00> : vector<24x32xf32>
      %31 = tpu.matmul %25, %29, %cst_18 {dimension_numbers = #tpu.dot_dimension_numbers<[1], [0], [0], [1], [0, 0, 1, 1], [], []>} : vector<24x128xbf16>, vector<128x32xbf16>, vector<24x32xf32> -> vector<24x32xf32>
      %32 = arith.addf %30, %31 : vector<24x32xf32>
      %c0_19 = arith.constant 0 : index
      %c0_20 = arith.constant 0 : index
      %33 = vector.load %arg17[%c0_19, %c0_20] : memref<24x32xf32, #tpu.memory_space<vmem>>, vector<24x32xf32>
      tpu.vector_store %arg17[%c0_19, %c0_20], %32 {strides = array<i32>} : memref<24x32xf32, #tpu.memory_space<vmem>>, vector<24x32xf32>,
    } else {
    }
    %c0_i32_9 = arith.constant 0 : i32
    %15 = arith.cmpi eq, %arg1, %c0_i32_9 : i32
    %16 = arith.extui %15 : i1 to i32
    %c0_i32_10 = arith.constant 0 : i32
    %17 = arith.cmpi ne, %16, %c0_i32_10 : i32
    scf.if %17 {
      %c0 = arith.constant 0 : index
      %c0_11 = arith.constant 0 : index
      %18 = vector.load %arg16[%c0, %c0_11] : memref<24x32xf32, #tpu.memory_space<vmem>>, vector<24x32xf32>
      %19 = arith.truncf %18 : vector<24x32xf32> to vector<24x32xbf16>
      %c0_12 = arith.constant 0 : index
      %c0_13 = arith.constant 0 : index
      %20 = vector.load %arg7[%c0_12, %c0_13] : memref<32x32xbf16, #tpu.memory_space<vmem>>, vector<32x32xbf16>
      %cst = arith.constant dense<0.000000e+00> : vector<24x32xf32>
      %21 = tpu.matmul %19, %20, %cst {dimension_numbers = #tpu.dot_dimension_numbers<[1], [0], [0], [1], [0, 0, 1, 1], [], []>} : vector<24x32xbf16>, vector<32x32xbf16>, vector<24x32xf32> -> vector<24x32xf32>
      %c0_14 = arith.constant 0 : index
      %c0_15 = arith.constant 0 : index
      %22 = vector.load %arg8[%c0_14, %c0_15] : memref<1x32xf32, #tpu.memory_space<vmem>>, vector<1x32xf32>
      %23 = vector.broadcast %22 : vector<1x32xf32> to vector<24x32xf32>
      %24 = arith.addf %21, %23 : vector<24x32xf32>
      %cst_16 = arith.constant 0.000000e+00 : f32
      %25 = vector.broadcast %cst_16 : f32 to vector<24x32xf32>
      %26 = arith.cmpf ogt, %24, %25 : vector<24x32xf32>
      %cst_17 = arith.constant 2.000000e-01 : f32
      %27 = vector.broadcast %cst_17 : f32 to vector<24x32xf32>
      %28 = arith.mulf %27, %24 : vector<24x32xf32>
      %29 = arith.select %26, %24, %28 : vector<24x32xi1>, vector<24x32xf32>
      %c0_18 = arith.constant 0 : index
      %c0_19 = arith.constant 0 : index
      %30 = vector.load %arg17[%c0_18, %c0_19] : memref<24x32xf32, #tpu.memory_space<vmem>>, vector<24x32xf32>
      %31 = arith.truncf %30 : vector<24x32xf32> to vector<24x32xbf16>
      %c0_20 = arith.constant 0 : index
      %c0_21 = arith.constant 0 : index
      %32 = vector.load %arg9[%c0_20, %c0_21] : memref<32x32xbf16, #tpu.memory_space<vmem>>, vector<32x32xbf16>
      %cst_22 = arith.constant dense<0.000000e+00> : vector<24x32xf32>
      %33 = tpu.matmul %31, %32, %cst_22 {dimension_numbers = #tpu.dot_dimension_numbers<[1], [0], [0], [1], [0, 0, 1, 1], [], []>} : vector<24x32xbf16>, vector<32x32xbf16>, vector<24x32xf32> -> vector<24x32xf32>
      %c0_23 = arith.constant 0 : index
      %c0_24 = arith.constant 0 : index
      %34 = vector.load %arg10[%c0_23, %c0_24] : memref<1x32xf32, #tpu.memory_space<vmem>>, vector<1x32xf32>
      %35 = vector.broadcast %34 : vector<1x32xf32> to vector<24x32xf32>
      %36 = arith.addf %33, %35 : vector<24x32xf32>
      %cst_25 = arith.constant 0.000000e+00 : f32
      %37 = vector.broadcast %cst_25 : f32 to vector<24x32xf32>
      %38 = arith.cmpf ogt, %36, %37 : vector<24x32xf32>
      %cst_26 = arith.constant 2.000000e-01 : f32
      %39 = vector.broadcast %cst_26 : f32 to vector<24x32xf32>
      %40 = arith.mulf %39, %36 : vector<24x32xf32>
      %41 = arith.select %38, %36, %40 : vector<24x32xi1>, vector<24x32xf32>
      %42 = arith.truncf %29 : vector<24x32xf32> to vector<24x32xbf16>
      %c0_27 = arith.constant 0 : index
      %c0_28 = arith.constant 0 : index
      %43 = vector.load %arg11[%c0_27, %c0_28] : memref<32x32xbf16, #tpu.memory_space<vmem>>, vector<32x32xbf16>
      %cst_29 = arith.constant dense<0.000000e+00> : vector<24x32xf32>
      %44 = tpu.matmul %42, %43, %cst_29 {dimension_numbers = #tpu.dot_dimension_numbers<[1], [0], [0], [1], [0, 0, 1, 1], [], []>} : vector<24x32xbf16>, vector<32x32xbf16>, vector<24x32xf32> -> vector<24x32xf32>
      %45 = arith.truncf %41 : vector<24x32xf32> to vector<24x32xbf16>
      %c0_30 = arith.constant 0 : index
      %c0_31 = arith.constant 0 : index
      %46 = vector.load %arg12[%c0_30, %c0_31] : memref<32x32xbf16, #tpu.memory_space<vmem>>, vector<32x32xbf16>
      %cst_32 = arith.constant dense<0.000000e+00> : vector<24x32xf32>
      %47 = tpu.matmul %45, %46, %cst_32 {dimension_numbers = #tpu.dot_dimension_numbers<[1], [0], [0], [1], [0, 0, 1, 1], [], []>} : vector<24x32xbf16>, vector<32x32xbf16>, vector<24x32xf32> -> vector<24x32xf32>
      %48 = arith.addf %44, %47 : vector<24x32xf32>
      %c0_33 = arith.constant 0 : index
      %c0_34 = arith.constant 0 : index
      %49 = vector.load %arg6[%c0_33, %c0_34] : memref<24x32xbf16, #tpu.memory_space<vmem>>, vector<24x32xbf16>
      %c0_35 = arith.constant 0 : index
      %c0_36 = arith.constant 0 : index
      %50 = vector.load %arg13[%c0_35, %c0_36] : memref<32x32xbf16, #tpu.memory_space<vmem>>, vector<32x32xbf16>
      %cst_37 = arith.constant dense<0.000000e+00> : vector<24x32xf32>
      %51 = tpu.matmul %49, %50, %cst_37 {dimension_numbers = #tpu.dot_dimension_numbers<[1], [0], [0], [1], [0, 0, 1, 1], [], []>} : vector<24x32xbf16>, vector<32x32xbf16>, vector<24x32xf32> -> vector<24x32xf32>
      %52 = arith.addf %48, %51 : vector<24x32xf32>
      %c0_38 = arith.constant 0 : index
      %c0_39 = arith.constant 0 : index
      %53 = vector.load %arg14[%c0_38, %c0_39] : memref<1x32xf32, #tpu.memory_space<vmem>>, vector<1x32xf32>
      %54 = vector.broadcast %53 : vector<1x32xf32> to vector<24x32xf32>
      %55 = arith.addf %52, %54 : vector<24x32xf32>
      %cst_40 = arith.constant 0.000000e+00 : f32
      %56 = vector.broadcast %cst_40 : f32 to vector<24x32xf32>
      %57 = arith.cmpf ogt, %55, %56 : vector<24x32xf32>
      %cst_41 = arith.constant 2.000000e-01 : f32
      %58 = vector.broadcast %cst_41 : f32 to vector<24x32xf32>
      %59 = arith.mulf %58, %55 : vector<24x32xf32>
      %60 = arith.select %57, %55, %59 : vector<24x32xi1>, vector<24x32xf32>
      %c0_42 = arith.constant 0 : index
      %c0_43 = arith.constant 0 : index
      %61 = vector.load %arg15[%c0_42, %c0_43] : memref<24x32xf32, #tpu.memory_space<vmem>>, vector<24x32xf32>
      tpu.vector_store %arg15[%c0_42, %c0_43], %60 {strides = array<i32>} : memref<24x32xf32, #tpu.memory_space<vmem>>, vector<24x32xf32>,
    } else {
    }
    return
  }
  func.func @transform_0(%arg0: i32, %arg1: i32) -> (i32, i32) {
    %c0_i32 = arith.constant 0 : i32
    %0 = arith.minsi %arg1, %c0_i32 : i32
    %c0_i32_0 = arith.constant 0 : i32
    return %arg0, %0 : i32, i32
  }
  func.func @transform_1(%arg0: i32, %arg1: i32) -> (i32, i32) {
    %c0_i32 = arith.constant 0 : i32
    %0 = arith.minsi %arg1, %c0_i32 : i32
    %c0_i32_0 = arith.constant 0 : i32
    return %arg0, %0 : i32, i32
  }
  func.func @transform_2(%arg0: i32, %arg1: i32) -> (i32, i32) {
    %c0_i32 = arith.constant 0 : i32
    %0 = arith.minsi %arg1, %c0_i32 : i32
    %c0_i32_0 = arith.constant 0 : i32
    %c0_i32_1 = arith.constant 0 : i32
    return %0, %c0_i32_0 : i32, i32
  }
  func.func @transform_3(%arg0: i32, %arg1: i32) -> (i32, i32) {
    %c0_i32 = arith.constant 0 : i32
    %0 = arith.minsi %arg1, %c0_i32 : i32
    %c0_i32_0 = arith.constant 0 : i32
    %c0_i32_1 = arith.constant 0 : i32
    return %0, %c0_i32_0 : i32, i32
  }
  func.func @transform_4(%arg0: i32, %arg1: i32) -> (i32, i32) {
    %c0_i32 = arith.constant 0 : i32
    %c0_i32_0 = arith.constant 0 : i32
    return %arg0, %c0_i32 : i32, i32
  }
  func.func @transform_5(%arg0: i32, %arg1: i32) -> (i32, i32) {
    %c0_i32 = arith.constant 0 : i32
    %c0_i32_0 = arith.constant 0 : i32
    %c0_i32_1 = arith.constant 0 : i32
    return %c0_i32, %c0_i32_0 : i32, i32
  }
  func.func @transform_6(%arg0: i32, %arg1: i32) -> (i32, i32) {
    %c0_i32 = arith.constant 0 : i32
    %c0_i32_0 = arith.constant 0 : i32
    %c0_i32_1 = arith.constant 0 : i32
    return %c0_i32, %c0_i32_0 : i32, i32
  }
  func.func @transform_7(%arg0: i32, %arg1: i32) -> (i32, i32) {
    %c0_i32 = arith.constant 0 : i32
    %c0_i32_0 = arith.constant 0 : i32
    %c0_i32_1 = arith.constant 0 : i32
    return %c0_i32, %c0_i32_0 : i32, i32
  }
  func.func @transform_8(%arg0: i32, %arg1: i32) -> (i32, i32) {
    %c0_i32 = arith.constant 0 : i32
    %c0_i32_0 = arith.constant 0 : i32
    %c0_i32_1 = arith.constant 0 : i32
    return %c0_i32, %c0_i32_0 : i32, i32
  }
  func.func @transform_9(%arg0: i32, %arg1: i32) -> (i32, i32) {
    %c0_i32 = arith.constant 0 : i32
    %c0_i32_0 = arith.constant 0 : i32
    %c0_i32_1 = arith.constant 0 : i32
    return %c0_i32, %c0_i32_0 : i32, i32
  }
  func.func @transform_10(%arg0: i32, %arg1: i32) -> (i32, i32) {
    %c0_i32 = arith.constant 0 : i32
    %c0_i32_0 = arith.constant 0 : i32
    %c0_i32_1 = arith.constant 0 : i32
    return %c0_i32, %c0_i32_0 : i32, i32
  }
  func.func @transform_11(%arg0: i32, %arg1: i32) -> (i32, i32) {
    %c0_i32 = arith.constant 0 : i32
    %c0_i32_0 = arith.constant 0 : i32
    %c0_i32_1 = arith.constant 0 : i32
    return %c0_i32, %c0_i32_0 : i32, i32
  }
  func.func @transform_12(%arg0: i32, %arg1: i32) -> (i32, i32) {
    %c0_i32 = arith.constant 0 : i32
    %c0_i32_0 = arith.constant 0 : i32
    %c0_i32_1 = arith.constant 0 : i32
    return %c0_i32, %c0_i32_0 : i32, i32
  }
  func.func @transform_13(%arg0: i32, %arg1: i32) -> (i32, i32) {
    %c0_i32 = arith.constant 0 : i32
    %c0_i32_0 = arith.constant 0 : i32
    return %arg0, %c0_i32 : i32, i32
  }
}

</mosaic_0001>

<llo_original>
// kernel: tpu_custom_call.1
$region0: #{tpu_custom_call.1}
  #allocation0 [shape = 'u32[]', space=smem, size = 0x4, offset = 0x4, fixed_abs, tag = 'smem constant byte address 0x4 - core index']
  #allocation1 [shape = 'u32[72,128]{1,0:T(1,128)}', space=vmem, size = 0x9000, scoped, tag = 'internal scratch']
  #allocation2 [shape = 'f32[24,32]{1,0:T(8,128)}', space=vmem, size = 0x3000, scoped, tag = 'scratch operand']
  #allocation3 [shape = 'f32[24,32]{1,0:T(8,128)}', space=vmem, size = 0x3000, scoped, tag = 'scratch operand']
  %s0 = inlined_call_operand.vmem [shape: bf16[48,48], index: 0, kind: input, shape index: {}]
  %s1 = inlined_call_operand.vmem [shape: bf16[48,40], index: 1, kind: input, shape index: {}]
  %s2 = inlined_call_operand.vmem [shape: bf16[48,32], index: 2, kind: input, shape index: {}]
  %s3 = inlined_call_operand.vmem [shape: bf16[40,32], index: 3, kind: input, shape index: {}]
  %s4 = inlined_call_operand.vmem [shape: bf16[48,32], index: 4, kind: input, shape index: {}]
  %s5 = inlined_call_operand.vmem [shape: bf16[32,32], index: 5, kind: input, shape index: {}]
  %s6 = inlined_call_operand.vmem [shape: f32[1,32], index: 6, kind: input, shape index: {}]
  %s7 = inlined_call_operand.vmem [shape: bf16[32,32], index: 7, kind: input, shape index: {}]
  %s8 = inlined_call_operand.vmem [shape: f32[1,32], index: 8, kind: input, shape index: {}]
  %s9 = inlined_call_operand.vmem [shape: bf16[32,32], index: 9, kind: input, shape index: {}]
  %s10 = inlined_call_operand.vmem [shape: bf16[32,32], index: 10, kind: input, shape index: {}]
  %s11 = inlined_call_operand.vmem [shape: bf16[32,32], index: 11, kind: input, shape index: {}]
  %s12 = inlined_call_operand.vmem [shape: f32[1,32], index: 12, kind: input, shape index: {}]
  %s13 = inlined_call_operand.vmem [shape: f32[48,32], index: 13, kind: output, shape index: {}]
  %s14 = sld [smem:[#allocation0]]
  $region105: #{tpu_custom_call.1} parent=0
    _
  %s16 = ssub.s32 1, %s14
  %s17 = scalar_select 0, %s16, %s14
  loop: start=0, step=1, limit=4
  $region2: #{tpu_custom_call.1} parent=0 // loop_pre_header
    _
  $region3: #{tpu_custom_call.1} parent=0 // loop_header
    %s19 = sphi 0, %s23
    %p20 = scmp.ge.s32.totalorder %s19, 4
    %s26 = sphi 0, %s38
    %s27 = sphi 0, %s34
    %s28 = sphi 0, %s26
    %s29 = sphi 0, %s27
    %s30 = sphi 0, %s28
    %s31 = sphi 0, %s29
    %s47 = sphi 0, %s49
    %s50 = sphi 0, %s47
    %s51 = sphi 0, %s50
    %s67 = sphi 0, %s51
    %s79 = sphi 0, %s81
    %s82 = sphi 0, %s79
    %s83 = sphi 0, %s82
    %s99 = sphi 0, %s83
    %s109 = sphi 0, %s111
    %s112 = sphi 0, %s109
    %s113 = sphi 0, %s112
    %s129 = sphi 0, %s113
    %s139 = sphi 0, %s141
    %s142 = sphi 0, %s139
    %s143 = sphi 0, %s142
    %s159 = sphi 0, %s143
    %s165 = sphi 0, %s167
    %s168 = sphi 0, %s165
    %s169 = sphi 0, %s168
    %s185 = sphi 0, %s169
    %s189 = sphi 0, %s189
    %s191 = sphi 0, %s189
    %s192 = sphi 0, %s191
    %s206 = sphi 0, %s192
    %s210 = sphi 0, %s210
    %s212 = sphi 0, %s210
    %s213 = sphi 0, %s212
    %s227 = sphi 0, %s213
    %s231 = sphi 0, %s231
    %s233 = sphi 0, %s231
    %s234 = sphi 0, %s233
    %s248 = sphi 0, %s234
    %s252 = sphi 0, %s252
    %s254 = sphi 0, %s252
    %s255 = sphi 0, %s254
    %s269 = sphi 0, %s255
    %s273 = sphi 0, %s273
    %s275 = sphi 0, %s273
    %s276 = sphi 0, %s275
    %s290 = sphi 0, %s276
    %s294 = sphi 0, %s294
    %s296 = sphi 0, %s294
    %s297 = sphi 0, %s296
    %s311 = sphi 0, %s297
    %s315 = sphi 0, %s315
    %s317 = sphi 0, %s315
    %s318 = sphi 0, %s317
    %s332 = sphi 0, %s318
    %s336 = sphi 0, %s336
    %s338 = sphi 0, %s336
    %s339 = sphi 0, %s338
    %s353 = sphi 0, %s339
    %s359 = sphi 0, %s361
    %s362 = sphi 0, %s359
    %s363 = sphi 0, %s362
    %s379 = sphi 0, %s363
  $region4: #{tpu_custom_call.1} parent=0 // loop_header_branch
    %22 = sbr.rel (%p20) target = $region8
  $region5: #{tpu_custom_call.1} parent=0 // loop_body
    %s24 = ssub.s32 %s19, 1
    %s25 = ssub.s32 %s19, 2
    %s32 = sadd.s32 1, %s27
    %p33 = scmp.ge.s32.totalorder %s32, 1
    %s34 = scalar_select %p33, 0, %s32
    %s35 = sadd.s32 1, %s26
    %s36 = scalar_select %p33, %s35, %s26
    %p37 = scmp.ge.s32.totalorder %s36, 2
    %s38 = scalar_select %p37, 0, %s36
    %p39 = scmp.lt.s32.totalorder %s27, 0
    %s40 = scalar_select %p39, %s27, 0
    %p41 = scmp.lt.s32.totalorder %s34, 0
    %s42 = scalar_select %p41, %s34, 0
    %s43 = ssub.s32 %s26, %s38
    %s44 = ssub.s32 %s40, %s42
    %s45 = sor.u32 %s43, %s44
    %p46 = scmp.eq.s32.totalorder %s45, 0
    %s48 = sadd.s32 %s47, 1
    %s49 = scalar_select %p46, %s47, %s48
    %p52 = pneg %p46
    %p53 = scmp.eq.s32.totalorder %s19, 1
    %p54 = por %p52, %p53
    %p55 = scmp.ne.s32.totalorder %s47, %s50
    %p56 = scmp.eq.s32.totalorder %s19, 0
    %p57 = por %p55, %p56
    %p58 = scmp.ne.s32.totalorder %s47, %s50
    %p59 = scmp.eq.s32.totalorder %s24, 1
    %p60 = por %p58, %p59
    %p61 = scmp.ne.s32.totalorder %s50, %s51
    %p62 = scmp.eq.s32.totalorder %s24, 0
    %p63 = por %p61, %p62
    %p64 = scmp.ne.s32.totalorder %s50, %s51
    %p65 = scmp.eq.s32.totalorder %s25, 1
    %p66 = por %p64, %p65
    %p68 = scmp.ne.s32.totalorder %s51, %s67
    %p69 = scmp.eq.s32.totalorder %s25, 0
    %p70 = por %p68, %p69
    %p71 = scmp.lt.s32.totalorder %s27, 0
    %s72 = scalar_select %p71, %s27, 0
    %p73 = scmp.lt.s32.totalorder %s34, 0
    %s74 = scalar_select %p73, %s34, 0
    %s75 = ssub.s32 %s26, %s38
    %s76 = ssub.s32 %s72, %s74
    %s77 = sor.u32 %s75, %s76
    %p78 = scmp.eq.s32.totalorder %s77, 0
    %s80 = sadd.s32 %s79, 1
    %s81 = scalar_select %p78, %s79, %s80
    %p84 = pneg %p78
    %p85 = scmp.eq.s32.totalorder %s19, 1
    %p86 = por %p84, %p85
    %p87 = scmp.ne.s32.totalorder %s79, %s82
    %p88 = scmp.eq.s32.totalorder %s19, 0
    %p89 = por %p87, %p88
    %p90 = scmp.ne.s32.totalorder %s79, %s82
    %p91 = scmp.eq.s32.totalorder %s24, 1
    %p92 = por %p90, %p91
    %p93 = scmp.ne.s32.totalorder %s82, %s83
    %p94 = scmp.eq.s32.totalorder %s24, 0
    %p95 = por %p93, %p94
    %p96 = scmp.ne.s32.totalorder %s82, %s83
    %p97 = scmp.eq.s32.totalorder %s25, 1
    %p98 = por %p96, %p97
    %p100 = scmp.ne.s32.totalorder %s83, %s99
    %p101 = scmp.eq.s32.totalorder %s25, 0
    %p102 = por %p100, %p101
    %p103 = scmp.lt.s32.totalorder %s27, 0
    %s104 = scalar_select %p103, %s27, 0
    %p105 = scmp.lt.s32.totalorder %s34, 0
    %s106 = scalar_select %p105, %s34, 0
    %s107 = ssub.s32 %s104, %s106
    %p108 = scmp.eq.s32.totalorder %s107, 0
    %s110 = sadd.s32 %s109, 1
    %s111 = scalar_select %p108, %s109, %s110
    %p114 = pneg %p108
    %p115 = scmp.eq.s32.totalorder %s19, 1
    %p116 = por %p114, %p115
    %p117 = scmp.ne.s32.totalorder %s109, %s112
    %p118 = scmp.eq.s32.totalorder %s19, 0
    %p119 = por %p117, %p118
    %p120 = scmp.ne.s32.totalorder %s109, %s112
    %p121 = scmp.eq.s32.totalorder %s24, 1
    %p122 = por %p120, %p121
    %p123 = scmp.ne.s32.totalorder %s112, %s113
    %p124 = scmp.eq.s32.totalorder %s24, 0
    %p125 = por %p123, %p124
    %p126 = scmp.ne.s32.totalorder %s112, %s113
    %p127 = scmp.eq.s32.totalorder %s25, 1
    %p128 = por %p126, %p127
    %p130 = scmp.ne.s32.totalorder %s113, %s129
    %p131 = scmp.eq.s32.totalorder %s25, 0
    %p132 = por %p130, %p131
    %p133 = scmp.lt.s32.totalorder %s27, 0
    %s134 = scalar_select %p133, %s27, 0
    %p135 = scmp.lt.s32.totalorder %s34, 0
    %s136 = scalar_select %p135, %s34, 0
    %s137 = ssub.s32 %s134, %s136
    %p138 = scmp.eq.s32.totalorder %s137, 0
    %s140 = sadd.s32 %s139, 1
    %s141 = scalar_select %p138, %s139, %s140
    %p144 = pneg %p138
    %p145 = scmp.eq.s32.totalorder %s19, 1
    %p146 = por %p144, %p145
    %p147 = scmp.ne.s32.totalorder %s139, %s142
    %p148 = scmp.eq.s32.totalorder %s19, 0
    %p149 = por %p147, %p148
    %p150 = scmp.ne.s32.totalorder %s139, %s142
    %p151 = scmp.eq.s32.totalorder %s24, 1
    %p152 = por %p150, %p151
    %p153 = scmp.ne.s32.totalorder %s142, %s143
    %p154 = scmp.eq.s32.totalorder %s24, 0
    %p155 = por %p153, %p154
    %p156 = scmp.ne.s32.totalorder %s142, %s143
    %p157 = scmp.eq.s32.totalorder %s25, 1
    %p158 = por %p156, %p157
    %p160 = scmp.ne.s32.totalorder %s143, %s159
    %p161 = scmp.eq.s32.totalorder %s25, 0
    %p162 = por %p160, %p161
    %s163 = ssub.s32 %s26, %s38
    %p164 = scmp.eq.s32.totalorder %s163, 0
    %s166 = sadd.s32 %s165, 1
    %s167 = scalar_select %p164, %s165, %s166
    %p170 = pneg %p164
    %p171 = scmp.eq.s32.totalorder %s19, 1
    %p172 = por %p170, %p171
    %p173 = scmp.ne.s32.totalorder %s165, %s168
    %p174 = scmp.eq.s32.totalorder %s19, 0
    %p175 = por %p173, %p174
    %p176 = scmp.ne.s32.totalorder %s165, %s168
    %p177 = scmp.eq.s32.totalorder %s24, 1
    %p178 = por %p176, %p177
    %p179 = scmp.ne.s32.totalorder %s168, %s169
    %p180 = scmp.eq.s32.totalorder %s24, 0
    %p181 = por %p179, %p180
    %p182 = scmp.ne.s32.totalorder %s168, %s169
    %p183 = scmp.eq.s32.totalorder %s25, 1
    %p184 = por %p182, %p183
    %p186 = scmp.ne.s32.totalorder %s169, %s185
    %p187 = scmp.eq.s32.totalorder %s25, 0
    %p188 = por %p186, %p187
    %s190 = sadd.s32 %s189, 1
    %p193 = scmp.eq.s32.totalorder %s19, 1
    %p194 = scmp.ne.s32.totalorder %s189, %s191
    %p195 = scmp.eq.s32.totalorder %s19, 0
    %p196 = por %p194, %p195
    %p197 = scmp.ne.s32.totalorder %s189, %s191
    %p198 = scmp.eq.s32.totalorder %s24, 1
    %p199 = por %p197, %p198
    %p200 = scmp.ne.s32.totalorder %s191, %s192
    %p201 = scmp.eq.s32.totalorder %s24, 0
    %p202 = por %p200, %p201
    %p203 = scmp.ne.s32.totalorder %s191, %s192
    %p204 = scmp.eq.s32.totalorder %s25, 1
    %p205 = por %p203, %p204
    %p207 = scmp.ne.s32.totalorder %s192, %s206
    %p208 = scmp.eq.s32.totalorder %s25, 0
    %p209 = por %p207, %p208
    %s211 = sadd.s32 %s210, 1
    %p214 = scmp.eq.s32.totalorder %s19, 1
    %p215 = scmp.ne.s32.totalorder %s210, %s212
    %p216 = scmp.eq.s32.totalorder %s19, 0
    %p217 = por %p215, %p216
    %p218 = scmp.ne.s32.totalorder %s210, %s212
    %p219 = scmp.eq.s32.totalorder %s24, 1
    %p220 = por %p218, %p219
    %p221 = scmp.ne.s32.totalorder %s212, %s213
    %p222 = scmp.eq.s32.totalorder %s24, 0
    %p223 = por %p221, %p222
    %p224 = scmp.ne.s32.totalorder %s212, %s213
    %p225 = scmp.eq.s32.totalorder %s25, 1
    %p226 = por %p224, %p225
    %p228 = scmp.ne.s32.totalorder %s213, %s227
    %p229 = scmp.eq.s32.totalorder %s25, 0
    %p230 = por %p228, %p229
    %s232 = sadd.s32 %s231, 1
    %p235 = scmp.eq.s32.totalorder %s19, 1
    %p236 = scmp.ne.s32.totalorder %s231, %s233
    %p237 = scmp.eq.s32.totalorder %s19, 0
    %p238 = por %p236, %p237
    %p239 = scmp.ne.s32.totalorder %s231, %s233
    %p240 = scmp.eq.s32.totalorder %s24, 1
    %p241 = por %p239, %p240
    %p242 = scmp.ne.s32.totalorder %s233, %s234
    %p243 = scmp.eq.s32.totalorder %s24, 0
    %p244 = por %p242, %p243
    %p245 = scmp.ne.s32.totalorder %s233, %s234
    %p246 = scmp.eq.s32.totalorder %s25, 1
    %p247 = por %p245, %p246
    %p249 = scmp.ne.s32.totalorder %s234, %s248
    %p250 = scmp.eq.s32.totalorder %s25, 0
    %p251 = por %p249, %p250
    %s253 = sadd.s32 %s252, 1
    %p256 = scmp.eq.s32.totalorder %s19, 1
    %p257 = scmp.ne.s32.totalorder %s252, %s254
    %p258 = scmp.eq.s32.totalorder %s19, 0
    %p259 = por %p257, %p258
    %p260 = scmp.ne.s32.totalorder %s252, %s254
    %p261 = scmp.eq.s32.totalorder %s24, 1
    %p262 = por %p260, %p261
    %p263 = scmp.ne.s32.totalorder %s254, %s255
    %p264 = scmp.eq.s32.totalorder %s24, 0
    %p265 = por %p263, %p264
    %p266 = scmp.ne.s32.totalorder %s254, %s255
    %p267 = scmp.eq.s32.totalorder %s25, 1
    %p268 = por %p266, %p267
    %p270 = scmp.ne.s32.totalorder %s255, %s269
    %p271 = scmp.eq.s32.totalorder %s25, 0
    %p272 = por %p270, %p271
    %s274 = sadd.s32 %s273, 1
    %p277 = scmp.eq.s32.totalorder %s19, 1
    %p278 = scmp.ne.s32.totalorder %s273, %s275
    %p279 = scmp.eq.s32.totalorder %s19, 0
    %p280 = por %p278, %p279
    %p281 = scmp.ne.s32.totalorder %s273, %s275
    %p282 = scmp.eq.s32.totalorder %s24, 1
    %p283 = por %p281, %p282
    %p284 = scmp.ne.s32.totalorder %s275, %s276
    %p285 = scmp.eq.s32.totalorder %s24, 0
    %p286 = por %p284, %p285
    %p287 = scmp.ne.s32.totalorder %s275, %s276
    %p288 = scmp.eq.s32.totalorder %s25, 1
    %p289 = por %p287, %p288
    %p291 = scmp.ne.s32.totalorder %s276, %s290
    %p292 = scmp.eq.s32.totalorder %s25, 0
    %p293 = por %p291, %p292
    %s295 = sadd.s32 %s294, 1
    %p298 = scmp.eq.s32.totalorder %s19, 1
    %p299 = scmp.ne.s32.totalorder %s294, %s296
    %p300 = scmp.eq.s32.totalorder %s19, 0
    %p301 = por %p299, %p300
    %p302 = scmp.ne.s32.totalorder %s294, %s296
    %p303 = scmp.eq.s32.totalorder %s24, 1
    %p304 = por %p302, %p303
    %p305 = scmp.ne.s32.totalorder %s296, %s297
    %p306 = scmp.eq.s32.totalorder %s24, 0
    %p307 = por %p305, %p306
    %p308 = scmp.ne.s32.totalorder %s296, %s297
    %p309 = scmp.eq.s32.totalorder %s25, 1
    %p310 = por %p308, %p309
    %p312 = scmp.ne.s32.totalorder %s297, %s311
    %p313 = scmp.eq.s32.totalorder %s25, 0
    %p314 = por %p312, %p313
    %s316 = sadd.s32 %s315, 1
    %p319 = scmp.eq.s32.totalorder %s19, 1
    %p320 = scmp.ne.s32.totalorder %s315, %s317
    %p321 = scmp.eq.s32.totalorder %s19, 0
    %p322 = por %p320, %p321
    %p323 = scmp.ne.s32.totalorder %s315, %s317
    %p324 = scmp.eq.s32.totalorder %s24, 1
    %p325 = por %p323, %p324
    %p326 = scmp.ne.s32.totalorder %s317, %s318
    %p327 = scmp.eq.s32.totalorder %s24, 0
    %p328 = por %p326, %p327
    %p329 = scmp.ne.s32.totalorder %s317, %s318
    %p330 = scmp.eq.s32.totalorder %s25, 1
    %p331 = por %p329, %p330
    %p333 = scmp.ne.s32.totalorder %s318, %s332
    %p334 = scmp.eq.s32.totalorder %s25, 0
    %p335 = por %p333, %p334
    %s337 = sadd.s32 %s336, 1
    %p340 = scmp.eq.s32.totalorder %s19, 1
    %p341 = scmp.ne.s32.totalorder %s336, %s338
    %p342 = scmp.eq.s32.totalorder %s19, 0
    %p343 = por %p341, %p342
    %p344 = scmp.ne.s32.totalorder %s336, %s338
    %p345 = scmp.eq.s32.totalorder %s24, 1
    %p346 = por %p344, %p345
    %p347 = scmp.ne.s32.totalorder %s338, %s339
    %p348 = scmp.eq.s32.totalorder %s24, 0
    %p349 = por %p347, %p348
    %p350 = scmp.ne.s32.totalorder %s338, %s339
    %p351 = scmp.eq.s32.totalorder %s25, 1
    %p352 = por %p350, %p351
    %p354 = scmp.ne.s32.totalorder %s339, %s353
    %p355 = scmp.eq.s32.totalorder %s25, 0
    %p356 = por %p354, %p355
    %s357 = ssub.s32 %s26, %s38
    %p358 = scmp.eq.s32.totalorder %s357, 0
    %s360 = sadd.s32 %s359, 1
    %s361 = scalar_select %p358, %s359, %s360
    %p364 = pneg %p358
    %p365 = scmp.eq.s32.totalorder %s19, 1
    %p366 = por %p364, %p365
    %p367 = scmp.ne.s32.totalorder %s359, %s362
    %p368 = scmp.eq.s32.totalorder %s19, 0
    %p369 = por %p367, %p368
    %p370 = scmp.ne.s32.totalorder %s359, %s362
    %p371 = scmp.eq.s32.totalorder %s24, 1
    %p372 = por %p370, %p371
    %p373 = scmp.ne.s32.totalorder %s362, %s363
    %p374 = scmp.eq.s32.totalorder %s24, 0
    %p375 = por %p373, %p374
    %p376 = scmp.ne.s32.totalorder %s362, %s363
    %p377 = scmp.eq.s32.totalorder %s25, 1
    %p378 = por %p376, %p377
    %p380 = scmp.ne.s32.totalorder %s363, %s379
    %p381 = scmp.eq.s32.totalorder %s25, 0
    %p382 = por %p380, %p381
    %p383 = scmp.le.s32.totalorder 1, %s19
    %p384 = scmp.lt.s32.totalorder %s19, 3
    %p385 = pnand %p383, %p384
    %p386 = pneg %p385
    // Predicated region
    $region9: #{tpu_custom_call.1} parent=5 // pred_check
      _
    $region10: #{tpu_custom_call.1} parent=5 // pred_check_branch
      %388 = sbr.rel (%p385) target = $region12
    $region11: #{tpu_custom_call.1} parent=5 // pred_region
      %s389 = ssub.s32 %s19, 1
      // Predicated region
      $region13: #{tpu_custom_call.1} parent=11 // pred_check
        %p390 = pneg %p125
      $region14: #{tpu_custom_call.1} parent=11 // pred_check_branch
        %392 = sbr.rel (%p390) target = $region16
      $region15: #{tpu_custom_call.1} parent=11 // pred_region
        %p393 = scmp.lt.s32.totalorder %s29, 0
        %s394 = scalar_select %p393, %s29, 0
        %s395 = smul.u32 16, %s394
        %s396 = ssub.s32 6, %s395
        %s397 = smul.u32 4, %s396
        %p398 = scmp.lt.s32.totalorder %s395, 5
        %s399 = scalar_select %p398, %s395, 5
        %s400 = smul.addr %s399, 4
        %s401 = scalar_lea.vmem %s2, %s400
        %p402 = scmp.lt.s32.totalorder %s29, 0
        %s403 = scalar_select %p402, %s29, 0
        %s404 = smul.u32 16, %s403
        %s405 = ssub.s32 6, %s404
        %s406 = smul.u32 4, %s405
      $region16: #{tpu_custom_call.1} parent=11 // pred_fallthru
        _
      // Predicated region
      $region17: #{tpu_custom_call.1} parent=11 // pred_check
        %p407 = pneg %p155
      $region18: #{tpu_custom_call.1} parent=11 // pred_check_branch
        %409 = sbr.rel (%p407) target = $region20
      $region19: #{tpu_custom_call.1} parent=11 // pred_region
        %p410 = scmp.lt.s32.totalorder %s29, 0
        %s411 = scalar_select %p410, %s29, 0
        %s412 = smul.u32 16, %s411
        %s413 = ssub.s32 5, %s412
        %s414 = smul.u32 4, %s413
        %p415 = scmp.lt.s32.totalorder %s412, 4
        %s416 = scalar_select %p415, %s412, 4
        %s417 = smul.addr %s416, 4
        %s418 = scalar_lea.vmem %s3, %s417
        %p419 = scmp.lt.s32.totalorder %s29, 0
        %s420 = scalar_select %p419, %s29, 0
        %s421 = smul.u32 16, %s420
        %s422 = ssub.s32 5, %s421
        %s423 = smul.u32 4, %s422
      $region20: #{tpu_custom_call.1} parent=11 // pred_fallthru
        _
      // Predicated region
      $region21: #{tpu_custom_call.1} parent=11 // pred_check
        %p424 = pneg %p202
      $region22: #{tpu_custom_call.1} parent=11 // pred_check_branch
        %426 = sbr.rel (%p424) target = $region24
      $region23: #{tpu_custom_call.1} parent=11 // pred_region
        _
      $region24: #{tpu_custom_call.1} parent=11 // pred_fallthru
        _
      // Predicated region
      $region25: #{tpu_custom_call.1} parent=11 // pred_check
        %p427 = pneg %p223
      $region26: #{tpu_custom_call.1} parent=11 // pred_check_branch
        %429 = sbr.rel (%p427) target = $region28
      $region27: #{tpu_custom_call.1} parent=11 // pred_region
        _
      $region28: #{tpu_custom_call.1} parent=11 // pred_fallthru
        _
      // Predicated region
      $region29: #{tpu_custom_call.1} parent=11 // pred_check
        %p430 = pneg %p244
      $region30: #{tpu_custom_call.1} parent=11 // pred_check_branch
        %432 = sbr.rel (%p430) target = $region32
      $region31: #{tpu_custom_call.1} parent=11 // pred_region
        _
      $region32: #{tpu_custom_call.1} parent=11 // pred_fallthru
        _
      // Predicated region
      $region33: #{tpu_custom_call.1} parent=11 // pred_check
        %p433 = pneg %p265
      $region34: #{tpu_custom_call.1} parent=11 // pred_check_branch
        %435 = sbr.rel (%p433) target = $region36
      $region35: #{tpu_custom_call.1} parent=11 // pred_region
        _
      $region36: #{tpu_custom_call.1} parent=11 // pred_fallthru
        _
      // Predicated region
      $region37: #{tpu_custom_call.1} parent=11 // pred_check
        %p436 = pneg %p286
      $region38: #{tpu_custom_call.1} parent=11 // pred_check_branch
        %438 = sbr.rel (%p436) target = $region40
      $region39: #{tpu_custom_call.1} parent=11 // pred_region
        _
      $region40: #{tpu_custom_call.1} parent=11 // pred_fallthru
        _
      // Predicated region
      $region41: #{tpu_custom_call.1} parent=11 // pred_check
        %p439 = pneg %p307
      $region42: #{tpu_custom_call.1} parent=11 // pred_check_branch
        %441 = sbr.rel (%p439) target = $region44
      $region43: #{tpu_custom_call.1} parent=11 // pred_region
        _
      $region44: #{tpu_custom_call.1} parent=11 // pred_fallthru
        _
      // Predicated region
      $region45: #{tpu_custom_call.1} parent=11 // pred_check
        %p442 = pneg %p328
      $region46: #{tpu_custom_call.1} parent=11 // pred_check_branch
        %444 = sbr.rel (%p442) target = $region48
      $region47: #{tpu_custom_call.1} parent=11 // pred_region
        _
      $region48: #{tpu_custom_call.1} parent=11 // pred_fallthru
        _
      // Predicated region
      $region49: #{tpu_custom_call.1} parent=11 // pred_check
        %p445 = pneg %p349
      $region50: #{tpu_custom_call.1} parent=11 // pred_check_branch
        %447 = sbr.rel (%p445) target = $region52
      $region51: #{tpu_custom_call.1} parent=11 // pred_region
        _
      $region52: #{tpu_custom_call.1} parent=11 // pred_fallthru
        _
    $region12: #{tpu_custom_call.1} parent=5 // pred_fallthru
      _
    %p448 = scmp.lt.s32.totalorder %s19, 2
    // Predicated region
    $region53: #{tpu_custom_call.1} parent=5 // pred_check
      %p449 = pneg %p448
    $region54: #{tpu_custom_call.1} parent=5 // pred_check_branch
      %451 = sbr.rel (%p449) target = $region56
    $region55: #{tpu_custom_call.1} parent=5 // pred_region
      // Predicated region
      $region57: #{tpu_custom_call.1} parent=55 // pred_check
        %p452 = pneg %p57
      $region58: #{tpu_custom_call.1} parent=55 // pred_check_branch
        %454 = sbr.rel (%p452) target = $region60
      $region59: #{tpu_custom_call.1} parent=55 // pred_region
        %p455 = scmp.lt.s32.totalorder %s27, 0
        %s456 = scalar_select %p455, %s27, 0
        %s457 = smul.u32 3, %s26
        %p458 = scmp.lt.s32.totalorder %s457, 5
        %s459 = scalar_select %p458, %s457, 5
        %p460 = scmp.lt.s32.totalorder %s456, 0
        %s461 = scalar_select %p460, %s456, 0
        %s462 = sadd.s32 %s461, %s459
        %s463 = smul.addr %s462, 4
        %s464 = scalar_lea.vmem %s0, %s463
        %p465 = scmp.lt.s32.totalorder %s27, 0
        %s466 = scalar_select %p465, %s27, 0
        %s467 = smul.u32 3, %s26
      $region60: #{tpu_custom_call.1} parent=55 // pred_fallthru
        _
      // Predicated region
      $region61: #{tpu_custom_call.1} parent=55 // pred_check
        %p468 = pneg %p89
      $region62: #{tpu_custom_call.1} parent=55 // pred_check_branch
        %470 = sbr.rel (%p468) target = $region64
      $region63: #{tpu_custom_call.1} parent=55 // pred_region
        %p471 = scmp.lt.s32.totalorder %s27, 0
        %s472 = scalar_select %p471, %s27, 0
        %s473 = smul.u32 3, %s26
        %p474 = scmp.lt.s32.totalorder %s473, 5
        %s475 = scalar_select %p474, %s473, 5
        %p476 = scmp.lt.s32.totalorder %s472, 0
        %s477 = scalar_select %p476, %s472, 0
        %s478 = sadd.s32 %s477, %s475
        %s479 = smul.addr %s478, 4
        %s480 = scalar_lea.vmem %s1, %s479
        %p481 = scmp.lt.s32.totalorder %s27, 0
        %s482 = scalar_select %p481, %s27, 0
        %s483 = smul.u32 3, %s26
      $region64: #{tpu_custom_call.1} parent=55 // pred_fallthru
        _
      // Predicated region
      $region65: #{tpu_custom_call.1} parent=55 // pred_check
        %p484 = pneg %p175
      $region66: #{tpu_custom_call.1} parent=55 // pred_check_branch
        %486 = sbr.rel (%p484) target = $region68
      $region67: #{tpu_custom_call.1} parent=55 // pred_region
        %s487 = smul.u32 3, %s26
        %p488 = scmp.lt.s32.totalorder %s487, 5
        %s489 = scalar_select %p488, %s487, 5
        %s490 = smul.addr %s489, 4
        %s491 = scalar_lea.vmem %s4, %s490
        %s492 = smul.u32 3, %s26
      $region68: #{tpu_custom_call.1} parent=55 // pred_fallthru
        _
    $region56: #{tpu_custom_call.1} parent=5 // pred_fallthru
      _
    %p493 = scmp.le.s32.totalorder 1, %s19
    %p494 = scmp.lt.s32.totalorder %s19, 3
    %p495 = pnand %p493, %p494
    %p496 = pneg %p495
    // Predicated region
    $region69: #{tpu_custom_call.1} parent=5 // pred_check
      _
    $region70: #{tpu_custom_call.1} parent=5 // pred_check_branch
      %498 = sbr.rel (%p495) target = $region72
    $region71: #{tpu_custom_call.1} parent=5 // pred_region
      %s499 = ssub.s32 %s19, 1
      %p500 = scmp.lt.s32.totalorder %s29, 0
      %s501 = scalar_select %p500, %s29, 0
      %s502 = smul.u32 3, %s28
      %p503 = scmp.lt.s32.totalorder %s502, 5
      %s504 = scalar_select %p503, %s502, 5
      %p505 = scmp.lt.s32.totalorder %s501, 0
      %s506 = scalar_select %p505, %s501, 0
      %s507 = sadd.s32 %s506, %s504
      %s508 = smul.addr %s507, 4
      %s509 = scalar_lea.vmem %s0, %s508
      %p510 = pneg %p63
      %p511 = pneg %p60
      %p512 = scmp.lt.s32.totalorder %s29, 0
      %s513 = scalar_select %p512, %s29, 0
      %s514 = smul.u32 3, %s28
      %p515 = scmp.lt.s32.totalorder %s514, 5
      %s516 = scalar_select %p515, %s514, 5
      %p517 = scmp.lt.s32.totalorder %s513, 0
      %s518 = scalar_select %p517, %s513, 0
      %s519 = sadd.s32 %s518, %s516
      %s520 = smul.addr %s519, 4
      %s521 = scalar_lea.vmem %s1, %s520
      %p522 = pneg %p95
      %p523 = pneg %p92
      %p524 = scmp.lt.s32.totalorder %s29, 0
      %s525 = scalar_select %p524, %s29, 0
      %s526 = smul.u32 16, %s525
      %s527 = ssub.s32 6, %s526
      %s528 = smul.u32 4, %s527
      %p529 = scmp.lt.s32.totalorder %s526, 5
      %s530 = scalar_select %p529, %s526, 5
      %s531 = smul.addr %s530, 4
      %s532 = scalar_lea.vmem %s2, %s531
      %p533 = pneg %p125
      %p534 = pneg %p122
      %p535 = scmp.lt.s32.totalorder %s29, 0
      %s536 = scalar_select %p535, %s29, 0
      %s537 = smul.u32 16, %s536
      %s538 = ssub.s32 5, %s537
      %s539 = smul.u32 4, %s538
      %p540 = scmp.lt.s32.totalorder %s537, 4
      %s541 = scalar_select %p540, %s537, 4
      %s542 = smul.addr %s541, 4
      %s543 = scalar_lea.vmem %s3, %s542
      %p544 = pneg %p155
      %p545 = pneg %p152
      %s546 = smul.u32 3, %s28
      %p547 = scmp.lt.s32.totalorder %s546, 5
      %s548 = scalar_select %p547, %s546, 5
      %s549 = smul.addr %s548, 4
      %s550 = scalar_lea.vmem %s4, %s549
      %p551 = pneg %p181
      %p552 = pneg %p178
      %p553 = pneg %p202
      %p554 = pneg %p199
      %p555 = pneg %p223
      %p556 = pneg %p220
      %p557 = pneg %p244
      %p558 = pneg %p241
      %p559 = pneg %p265
      %p560 = pneg %p262
      %p561 = pneg %p286
      %p562 = pneg %p283
      %p563 = pneg %p307
      %p564 = pneg %p304
      %p565 = pneg %p328
      %p566 = pneg %p325
      %p567 = pneg %p349
      %p568 = pneg %p346
      %p569 = pneg %p375
      %p570 = pneg %p372
      %s571 = smul.u32 3, %s28
      %p572 = scmp.lt.s32.totalorder %s571, 5
      %s573 = scalar_select %p572, %s571, 5
      %s574 = smul.addr %s573, 8
      %s575 = scalar_lea.vmem %s13, %s574
      %p576 = scmp.lt.s32.totalorder %s29, 0
      %s577 = scalar_select %p576, %s29, 0
      %s578 = smul.u32 3, %s28
      %p579 = scmp.lt.s32.totalorder %s578, 5
      %s580 = scalar_select %p579, %s578, 5
      %p581 = scmp.lt.s32.totalorder %s577, 0
      %s582 = scalar_select %p581, %s577, 0
      %s583 = sadd.s32 %s582, %s580
      %s584 = smul.addr %s583, 4
      %s585 = scalar_lea.vmem %s0, %s584
      %p586 = scmp.lt.s32.totalorder %s29, 0
      %s587 = scalar_select %p586, %s29, 0
      %s588 = smul.u32 3, %s28
      %p589 = scmp.lt.s32.totalorder %s29, 0
      %s590 = scalar_select %p589, %s29, 0
      %s591 = smul.u32 3, %s28
      %p592 = scmp.lt.s32.totalorder %s591, 5
      %s593 = scalar_select %p592, %s591, 5
      %p594 = scmp.lt.s32.totalorder %s590, 0
      %s595 = scalar_select %p594, %s590, 0
      %s596 = sadd.s32 %s595, %s593
      %s597 = smul.addr %s596, 4
      %s598 = scalar_lea.vmem %s1, %s597
      %p599 = scmp.lt.s32.totalorder %s29, 0
      %s600 = scalar_select %p599, %s29, 0
      %s601 = smul.u32 3, %s28
      %p602 = scmp.lt.s32.totalorder %s29, 0
      %s603 = scalar_select %p602, %s29, 0
      %s604 = smul.u32 16, %s603
      %s605 = ssub.s32 6, %s604
      %s606 = smul.u32 4, %s605
      %p607 = scmp.lt.s32.totalorder %s604, 5
      %s608 = scalar_select %p607, %s604, 5
      %s609 = smul.addr %s608, 4
      %s610 = scalar_lea.vmem %s2, %s609
      %p611 = scmp.lt.s32.totalorder %s29, 0
      %s612 = scalar_select %p611, %s29, 0
      %s613 = smul.u32 16, %s612
      %s614 = ssub.s32 6, %s613
      %s615 = smul.u32 4, %s614
      %p616 = scmp.lt.s32.totalorder %s29, 0
      %s617 = scalar_select %p616, %s29, 0
      %s618 = smul.u32 16, %s617
      %s619 = ssub.s32 5, %s618
      %s620 = smul.u32 4, %s619
      %p621 = scmp.lt.s32.totalorder %s618, 4
      %s622 = scalar_select %p621, %s618, 4
      %s623 = smul.addr %s622, 4
      %s624 = scalar_lea.vmem %s3, %s623
      %p625 = scmp.lt.s32.totalorder %s29, 0
      %s626 = scalar_select %p625, %s29, 0
      %s627 = smul.u32 16, %s626
      %s628 = ssub.s32 5, %s627
      %s629 = smul.u32 4, %s628
      %s630 = smul.u32 3, %s28
      %p631 = scmp.lt.s32.totalorder %s630, 5
      %s632 = scalar_select %p631, %s630, 5
      %s633 = smul.addr %s632, 4
      %s634 = scalar_lea.vmem %s4, %s633
      %s635 = smul.u32 3, %s28
      %s636 = smul.u32 3, %s28
      %p637 = scmp.lt.s32.totalorder %s636, 5
      %s638 = scalar_select %p637, %s636, 5
      %s639 = smul.addr %s638, 8
      %s640 = scalar_lea.vmem %s13, %s639
      %s641 = smul.u32 3, %s28
      %p643 = scmp.eq.s32.totalorder %s29, 0
      // Predicated region
      $region73: #{tpu_custom_call.1} parent=71 // pred_check
        %p644 = pneg %p643
      $region74: #{tpu_custom_call.1} parent=71 // pred_check_branch
        %646 = sbr.rel (%p644) target = $region76
      $region75: #{tpu_custom_call.1} parent=71 // pred_region
        %vm647 = vcmask 261120
        %648 = vst.msk [vmem:[#allocation2] sm:$0xff] %vm647, 0.0
        %649 = vst.msk [vmem:[#allocation2 + $0x8] sm:$0xff] %vm647, 0.0
        %650 = vst.msk [vmem:[#allocation2 + $0x10] sm:$0xff] %vm647, 0.0
        %651 = vst.msk [vmem:[#allocation3] sm:$0xff] %vm647, 0.0
        %652 = vst.msk [vmem:[#allocation3 + $0x8] sm:$0xff] %vm647, 0.0
        %653 = vst.msk [vmem:[#allocation3 + $0x10] sm:$0xff] %vm647, 0.0
      $region76: #{tpu_custom_call.1} parent=71 // pred_fallthru
        _
      %p654 = scmp.lt.s32.totalorder %s29, 0
      // Predicated region
      $region77: #{tpu_custom_call.1} parent=71 // pred_check
        %p655 = pneg %p654
      $region78: #{tpu_custom_call.1} parent=71 // pred_check_branch
        %657 = sbr.rel (%p655) target = $region80
      $region79: #{tpu_custom_call.1} parent=71 // pred_region
        %v658 = vld [vmem:[%s585] sm:$0xf]
        %v659 = vld [vmem:[%s585 + $0x4] sm:$0xf]
        %v660 = vld [vmem:[%s585 + $0x8] sm:$0xf]
        %v661 = vld [vmem:[%s610] sm:$0xf]
        %v662 = vld [vmem:[%s610 + $0x4] sm:$0xf]
        %v663 = vld [vmem:[%s610 + $0x8] sm:$0xf]
        %v664 = vld [vmem:[%s610 + $0xc] sm:$0xf]
        %v665 = vld [vmem:[%s610 + $0x10] sm:$0xf]
        %v666 = vld [vmem:[%s610 + $0x14] sm:$0xf]
        %v667 = vld [vmem:[%s610 + $0x18] sm:$0xf]
        %v668 = vld [vmem:[%s610 + $0x1c] sm:$0xf]
        %v669 = vld [vmem:[%s610 + $0x20] sm:$0xf]
        %v670 = vld [vmem:[%s610 + $0x24] sm:$0xf]
        %v671 = vld [vmem:[%s610 + $0x28] sm:$0xf]
        %v672 = vld [vmem:[%s610 + $0x2c] sm:$0xf]
        %v673 = vld [vmem:[%s610 + $0x30] sm:$0xf]
        %v674 = vld [vmem:[%s610 + $0x34] sm:$0xf]
        %v675 = vld [vmem:[%s610 + $0x38] sm:$0xf]
        %v676 = vld [vmem:[%s610 + $0x3c] sm:$0xf]
        %v677 = vld [vmem:[#allocation2] sm:$0xff]
        %v678 = vld [vmem:[#allocation2 + $0x8] sm:$0xff]
        %v679 = vld [vmem:[#allocation2 + $0x10] sm:$0xff]
        %v683 = vunpack.c.l.b16 %v658
        %v684 = vunpack.c.l.b16 %v659
        %v685 = vunpack.c.l.b16 %v660
        %v686 = vpack.c.b16 %v684, %v683
        %v687 = vpack.c.b16 %v685, %v685
        %v706 = vunpack.c.l.b16 %v661
        %v707 = vunpack.c.l.b16 %v662
        %v708 = vunpack.c.l.b16 %v663
        %v709 = vunpack.c.l.b16 %v664
        %v710 = vunpack.c.l.b16 %v665
        %v711 = vunpack.c.l.b16 %v666
        %v712 = vunpack.c.l.b16 %v667
        %v713 = vunpack.c.l.b16 %v668
        %v714 = vunpack.c.l.b16 %v669
        %v715 = vunpack.c.l.b16 %v670
        %v716 = vunpack.c.l.b16 %v671
        %v717 = vunpack.c.l.b16 %v672
        %v718 = vunpack.c.l.b16 %v673
        %v719 = vunpack.c.l.b16 %v674
        %v720 = vunpack.c.l.b16 %v675
        %v721 = vunpack.c.l.b16 %v676
        %v722 = vpack.c.b16 %v707, %v706
        %v723 = vpack.c.b16 %v709, %v708
        %v724 = vpack.c.b16 %v711, %v710
        %v725 = vpack.c.b16 %v713, %v712
        %v726 = vpack.c.b16 %v715, %v714
        %v727 = vpack.c.b16 %v717, %v716
        %v728 = vpack.c.b16 %v719, %v718
        %v729 = vpack.c.b16 %v721, %v720
        %738 = vmatpush.bf16.msra.mxu0 %v729
        %739 = vmatpush.bf16.msra.mxu0 %v728
        %740 = vmatpush.bf16.msra.mxu0 %v727
        %741 = vmatpush.bf16.msra.mxu0 %v726
        %742 = vmatpush.bf16.msra.mxu0 %v725
        %743 = vmatpush.bf16.msra.mxu0 %v724
        %744 = vmatpush.bf16.msra.mxu0 %v723
        %745 = vmatpush.bf16.msra.mxu0 %v722
        %746 = vmatmul.bf16.gmra.mxu0 %v686
        %v747 = vpop.f32.mrf.mxu0
        %v748 = vadd.f32 0.0, %v747
        %v749 = vpop.f32.mrf.mxu0
        %v750 = vadd.f32 0.0, %v749
        %751 = vmatmul.bf16.gmra.mxu0 %v687
        %v752 = vpop.f32.mrf.mxu0
        %v753 = vadd.f32 0.0, %v752
        %v754 = vpop.f32.mrf.mxu0
        %755 = vdwg.mxu0
        %v756 = vadd.f32 %v677, %v748
        %v757 = vadd.f32 %v678, %v750
        %v758 = vadd.f32 %v679, %v753
        %vm759 = vcmask 261120
        %760 = vst.msk [vmem:[#allocation2] sm:$0xff] %vm759, %v756
        %761 = vst.msk [vmem:[#allocation2 + $0x8] sm:$0xff] %vm759, %v757
        %762 = vst.msk [vmem:[#allocation2 + $0x10] sm:$0xff] %vm759, %v758
      $region80: #{tpu_custom_call.1} parent=71 // pred_fallthru
        _
      // Predicated region
      $region81: #{tpu_custom_call.1} parent=71 // pred_check
        %p763 = pneg %p643
      $region82: #{tpu_custom_call.1} parent=71 // pred_check_branch
        %765 = sbr.rel (%p763) target = $region84
      $region83: #{tpu_custom_call.1} parent=71 // pred_region
        %v766 = vld [vmem:[%s585] sm:$0xf]
        %v767 = vld [vmem:[%s585 + $0x4] sm:$0xf]
        %v768 = vld [vmem:[%s585 + $0x8] sm:$0xf]
        %v769 = vld [vmem:[%s610] sm:$0xf]
        %v770 = vld [vmem:[%s610 + $0x4] sm:$0xf]
        %v771 = vld [vmem:[%s610 + $0x8] sm:$0xf]
        %v772 = vld [vmem:[%s610 + $0xc] sm:$0xf]
        %v773 = vld [vmem:[%s610 + $0x10] sm:$0xf]
        %v774 = vld [vmem:[%s610 + $0x14] sm:$0xf]
        %v775 = vld [vmem:[%s610 + $0x18] sm:$0xf]
        %v776 = vld [vmem:[%s610 + $0x1c] sm:$0xf]
        %v777 = vld [vmem:[%s610 + $0x20] sm:$0xf]
        %v778 = vld [vmem:[%s610 + $0x24] sm:$0xf]
        %v779 = vld [vmem:[%s610 + $0x28] sm:$0xf]
        %v780 = vld [vmem:[%s610 + $0x2c] sm:$0xf]
        %v781 = vld [vmem:[%s610 + $0x30] sm:$0xf]
        %v782 = vld [vmem:[%s610 + $0x34] sm:$0xf]
        %v783 = vld [vmem:[%s610 + $0x38] sm:$0xf]
        %v784 = vld [vmem:[%s610 + $0x3c] sm:$0xf]
        %v785 = vlaneseq
        %v786 = vand.u32 %v785, 127
        %v787 = vlaneseq
        %v788 = vshrl.u32 %v787, 7
        %v789 = vadd.s32 %v788, 8
        %v790 = vadd.s32 %v788, 16
        %v791 = vadd.s32 %v788, 24
        %v792 = vadd.s32 %v788, 32
        %v793 = vadd.s32 %v788, 40
        %v794 = vadd.s32 %v788, 48
        %v795 = vadd.s32 %v788, 56
        %v796 = vadd.s32 %v788, 64
        %v797 = vadd.s32 %v788, 72
        %v798 = vadd.s32 %v788, 80
        %v799 = vadd.s32 %v788, 88
        %v800 = vadd.s32 %v788, 96
        %v801 = vadd.s32 %v788, 104
        %v802 = vadd.s32 %v788, 112
        %v803 = vadd.s32 %v788, 120
        %vm804 = vcmp.lt.s32.totalorder %v786, 48
        %vm805 = vmpackc.low %vm804, %vm804
        %v806 = vsel %vm805, %v766, 0
        %v807 = vsel %vm805, %v767, 0
        %v808 = vsel %vm805, %v768, 0
        %vm809 = vcmp.lt.s32.totalorder %v788, 48
        %vm810 = vcmp.lt.s32.totalorder %v789, 48
        %vm811 = vcmp.lt.s32.totalorder %v790, 48
        %vm812 = vcmp.lt.s32.totalorder %v791, 48
        %vm813 = vcmp.lt.s32.totalorder %v792, 48
        %vm814 = vcmp.lt.s32.totalorder %v793, 48
        %vm815 = vcmp.lt.s32.totalorder %v794, 48
        %vm816 = vcmp.lt.s32.totalorder %v795, 48
        %vm817 = vcmp.lt.s32.totalorder %v796, 48
        %vm818 = vcmp.lt.s32.totalorder %v797, 48
        %vm819 = vcmp.lt.s32.totalorder %v798, 48
        %vm820 = vcmp.lt.s32.totalorder %v799, 48
        %vm821 = vcmp.lt.s32.totalorder %v800, 48
        %vm822 = vcmp.lt.s32.totalorder %v801, 48
        %vm823 = vcmp.lt.s32.totalorder %v802, 48
        %vm824 = vcmp.lt.s32.totalorder %v803, 48
        %vm825 = vmpackc.low %vm809, %vm809
        %vm826 = vmpackc.low %vm810, %vm810
        %vm827 = vmpackc.low %vm811, %vm811
        %vm828 = vmpackc.low %vm812, %vm812
        %vm829 = vmpackc.low %vm813, %vm813
        %vm830 = vmpackc.low %vm814, %vm814
        %vm831 = vmpackc.low %vm815, %vm815
        %vm832 = vmpackc.low %vm816, %vm816
        %vm833 = vmpackc.low %vm817, %vm817
        %vm834 = vmpackc.low %vm818, %vm818
        %vm835 = vmpackc.low %vm819, %vm819
        %vm836 = vmpackc.low %vm820, %vm820
        %vm837 = vmpackc.low %vm821, %vm821
        %vm838 = vmpackc.low %vm822, %vm822
        %vm839 = vmpackc.low %vm823, %vm823
        %vm840 = vmpackc.low %vm824, %vm824
        %v841 = vsel %vm825, %v769, 0
        %v842 = vsel %vm826, %v770, 0
        %v843 = vsel %vm827, %v771, 0
        %v844 = vsel %vm828, %v772, 0
        %v845 = vsel %vm829, %v773, 0
        %v846 = vsel %vm830, %v774, 0
        %v847 = vsel %vm831, %v775, 0
        %v848 = vsel %vm832, %v776, 0
        %v849 = vsel %vm833, %v777, 0
        %v850 = vsel %vm834, %v778, 0
        %v851 = vsel %vm835, %v779, 0
        %v852 = vsel %vm836, %v780, 0
        %v853 = vsel %vm837, %v781, 0
        %v854 = vsel %vm838, %v782, 0
        %v855 = vsel %vm839, %v783, 0
        %v856 = vsel %vm840, %v784, 0
        %v857 = vld [vmem:[#allocation2] sm:$0xff]
        %v858 = vld [vmem:[#allocation2 + $0x8] sm:$0xff]
        %v859 = vld [vmem:[#allocation2 + $0x10] sm:$0xff]
        %v863 = vunpack.c.l.b16 %v806
        %v864 = vunpack.c.l.b16 %v807
        %v865 = vunpack.c.l.b16 %v808
        %v866 = vpack.c.b16 %v864, %v863
        %v867 = vpack.c.b16 %v865, %v865
        %v886 = vunpack.c.l.b16 %v841
        %v887 = vunpack.c.l.b16 %v842
        %v888 = vunpack.c.l.b16 %v843
        %v889 = vunpack.c.l.b16 %v844
        %v890 = vunpack.c.l.b16 %v845
        %v891 = vunpack.c.l.b16 %v846
        %v892 = vunpack.c.l.b16 %v847
        %v893 = vunpack.c.l.b16 %v848
        %v894 = vunpack.c.l.b16 %v849
        %v895 = vunpack.c.l.b16 %v850
        %v896 = vunpack.c.l.b16 %v851
        %v897 = vunpack.c.l.b16 %v852
        %v898 = vunpack.c.l.b16 %v853
        %v899 = vunpack.c.l.b16 %v854
        %v900 = vunpack.c.l.b16 %v855
        %v901 = vunpack.c.l.b16 %v856
        %v902 = vpack.c.b16 %v887, %v886
        %v903 = vpack.c.b16 %v889, %v888
        %v904 = vpack.c.b16 %v891, %v890
        %v905 = vpack.c.b16 %v893, %v892
        %v906 = vpack.c.b16 %v895, %v894
        %v907 = vpack.c.b16 %v897, %v896
        %v908 = vpack.c.b16 %v899, %v898
        %v909 = vpack.c.b16 %v901, %v900
        %918 = vmatpush.bf16.msra.mxu0 %v909
        %919 = vmatpush.bf16.msra.mxu0 %v908
        %920 = vmatpush.bf16.msra.mxu0 %v907
        %921 = vmatpush.bf16.msra.mxu0 %v906
        %922 = vmatpush.bf16.msra.mxu0 %v905
        %923 = vmatpush.bf16.msra.mxu0 %v904
        %924 = vmatpush.bf16.msra.mxu0 %v903
        %925 = vmatpush.bf16.msra.mxu0 %v902
        %926 = vmatmul.bf16.gmra.mxu0 %v866
        %v927 = vpop.f32.mrf.mxu0
        %v928 = vadd.f32 0.0, %v927
        %v929 = vpop.f32.mrf.mxu0
        %v930 = vadd.f32 0.0, %v929
        %931 = vmatmul.bf16.gmra.mxu0 %v867
        %v932 = vpop.f32.mrf.mxu0
        %v933 = vadd.f32 0.0, %v932
        %v934 = vpop.f32.mrf.mxu0
        %935 = vdwg.mxu0
        %v936 = vadd.f32 %v857, %v928
        %v937 = vadd.f32 %v858, %v930
        %v938 = vadd.f32 %v859, %v933
        %vm939 = vcmask 261120
        %940 = vst.msk [vmem:[#allocation2] sm:$0xff] %vm939, %v936
        %941 = vst.msk [vmem:[#allocation2 + $0x8] sm:$0xff] %vm939, %v937
        %942 = vst.msk [vmem:[#allocation2 + $0x10] sm:$0xff] %vm939, %v938
      $region84: #{tpu_custom_call.1} parent=71 // pred_fallthru
        _
      // Predicated region
      $region85: #{tpu_custom_call.1} parent=71 // pred_check
        %p943 = pneg %p654
      $region86: #{tpu_custom_call.1} parent=71 // pred_check_branch
        %945 = sbr.rel (%p943) target = $region88
      $region87: #{tpu_custom_call.1} parent=71 // pred_region
        %v946 = vld [vmem:[%s598] sm:$0xf]
        %v947 = vld [vmem:[%s598 + $0x4] sm:$0xf]
        %v948 = vld [vmem:[%s598 + $0x8] sm:$0xf]
        %v949 = vld [vmem:[%s624] sm:$0xf]
        %v950 = vld [vmem:[%s624 + $0x4] sm:$0xf]
        %v951 = vld [vmem:[%s624 + $0x8] sm:$0xf]
        %v952 = vld [vmem:[%s624 + $0xc] sm:$0xf]
        %v953 = vld [vmem:[%s624 + $0x10] sm:$0xf]
        %v954 = vld [vmem:[%s624 + $0x14] sm:$0xf]
        %v955 = vld [vmem:[%s624 + $0x18] sm:$0xf]
        %v956 = vld [vmem:[%s624 + $0x1c] sm:$0xf]
        %v957 = vld [vmem:[%s624 + $0x20] sm:$0xf]
        %v958 = vld [vmem:[%s624 + $0x24] sm:$0xf]
        %v959 = vld [vmem:[%s624 + $0x28] sm:$0xf]
        %v960 = vld [vmem:[%s624 + $0x2c] sm:$0xf]
        %v961 = vld [vmem:[%s624 + $0x30] sm:$0xf]
        %v962 = vld [vmem:[%s624 + $0x34] sm:$0xf]
        %v963 = vld [vmem:[%s624 + $0x38] sm:$0xf]
        %v964 = vld [vmem:[%s624 + $0x3c] sm:$0xf]
        %v965 = vld [vmem:[#allocation3] sm:$0xff]
        %v966 = vld [vmem:[#allocation3 + $0x8] sm:$0xff]
        %v967 = vld [vmem:[#allocation3 + $0x10] sm:$0xff]
        %v971 = vunpack.c.l.b16 %v946
        %v972 = vunpack.c.l.b16 %v947
        %v973 = vunpack.c.l.b16 %v948
        %v974 = vpack.c.b16 %v972, %v971
        %v975 = vpack.c.b16 %v973, %v973
        %v994 = vunpack.c.l.b16 %v949
        %v995 = vunpack.c.l.b16 %v950
        %v996 = vunpack.c.l.b16 %v951
        %v997 = vunpack.c.l.b16 %v952
        %v998 = vunpack.c.l.b16 %v953
        %v999 = vunpack.c.l.b16 %v954
        %v1000 = vunpack.c.l.b16 %v955
        %v1001 = vunpack.c.l.b16 %v956
        %v1002 = vunpack.c.l.b16 %v957
        %v1003 = vunpack.c.l.b16 %v958
        %v1004 = vunpack.c.l.b16 %v959
        %v1005 = vunpack.c.l.b16 %v960
        %v1006 = vunpack.c.l.b16 %v961
        %v1007 = vunpack.c.l.b16 %v962
        %v1008 = vunpack.c.l.b16 %v963
        %v1009 = vunpack.c.l.b16 %v964
        %v1010 = vpack.c.b16 %v995, %v994
        %v1011 = vpack.c.b16 %v997, %v996
        %v1012 = vpack.c.b16 %v999, %v998
        %v1013 = vpack.c.b16 %v1001, %v1000
        %v1014 = vpack.c.b16 %v1003, %v1002
        %v1015 = vpack.c.b16 %v1005, %v1004
        %v1016 = vpack.c.b16 %v1007, %v1006
        %v1017 = vpack.c.b16 %v1009, %v1008
        %1026 = vmatpush.bf16.msra.mxu0 %v1017
        %1027 = vmatpush.bf16.msra.mxu0 %v1016
        %1028 = vmatpush.bf16.msra.mxu0 %v1015
        %1029 = vmatpush.bf16.msra.mxu0 %v1014
        %1030 = vmatpush.bf16.msra.mxu0 %v1013
        %1031 = vmatpush.bf16.msra.mxu0 %v1012
        %1032 = vmatpush.bf16.msra.mxu0 %v1011
        %1033 = vmatpush.bf16.msra.mxu0 %v1010
        %1034 = vmatmul.bf16.gmra.mxu0 %v974
        %v1035 = vpop.f32.mrf.mxu0
        %v1036 = vadd.f32 0.0, %v1035
        %v1037 = vpop.f32.mrf.mxu0
        %v1038 = vadd.f32 0.0, %v1037
        %1039 = vmatmul.bf16.gmra.mxu0 %v975
        %v1040 = vpop.f32.mrf.mxu0
        %v1041 = vadd.f32 0.0, %v1040
        %v1042 = vpop.f32.mrf.mxu0
        %1043 = vdwg.mxu0
        %v1044 = vadd.f32 %v965, %v1036
        %v1045 = vadd.f32 %v966, %v1038
        %v1046 = vadd.f32 %v967, %v1041
        %vm1047 = vcmask 261120
        %1048 = vst.msk [vmem:[#allocation3] sm:$0xff] %vm1047, %v1044
        %1049 = vst.msk [vmem:[#allocation3 + $0x8] sm:$0xff] %vm1047, %v1045
        %1050 = vst.msk [vmem:[#allocation3 + $0x10] sm:$0xff] %vm1047, %v1046
      $region88: #{tpu_custom_call.1} parent=71 // pred_fallthru
        _
      // Predicated region
      $region89: #{tpu_custom_call.1} parent=71 // pred_check
        %p1051 = pneg %p643
      $region90: #{tpu_custom_call.1} parent=71 // pred_check_branch
        %1053 = sbr.rel (%p1051) target = $region92
      $region91: #{tpu_custom_call.1} parent=71 // pred_region
        %v1054 = vld [vmem:[%s598] sm:$0xf]
        %v1055 = vld [vmem:[%s598 + $0x4] sm:$0xf]
        %v1056 = vld [vmem:[%s598 + $0x8] sm:$0xf]
        %v1057 = vld [vmem:[%s624] sm:$0xf]
        %v1058 = vld [vmem:[%s624 + $0x4] sm:$0xf]
        %v1059 = vld [vmem:[%s624 + $0x8] sm:$0xf]
        %v1060 = vld [vmem:[%s624 + $0xc] sm:$0xf]
        %v1061 = vld [vmem:[%s624 + $0x10] sm:$0xf]
        %v1062 = vld [vmem:[%s624 + $0x14] sm:$0xf]
        %v1063 = vld [vmem:[%s624 + $0x18] sm:$0xf]
        %v1064 = vld [vmem:[%s624 + $0x1c] sm:$0xf]
        %v1065 = vld [vmem:[%s624 + $0x20] sm:$0xf]
        %v1066 = vld [vmem:[%s624 + $0x24] sm:$0xf]
        %v1067 = vld [vmem:[%s624 + $0x28] sm:$0xf]
        %v1068 = vld [vmem:[%s624 + $0x2c] sm:$0xf]
        %v1069 = vld [vmem:[%s624 + $0x30] sm:$0xf]
        %v1070 = vld [vmem:[%s624 + $0x34] sm:$0xf]
        %v1071 = vld [vmem:[%s624 + $0x38] sm:$0xf]
        %v1072 = vld [vmem:[%s624 + $0x3c] sm:$0xf]
        %v1073 = vlaneseq
        %v1074 = vand.u32 %v1073, 127
        %v1075 = vlaneseq
        %v1076 = vshrl.u32 %v1075, 7
        %v1077 = vadd.s32 %v1076, 8
        %v1078 = vadd.s32 %v1076, 16
        %v1079 = vadd.s32 %v1076, 24
        %v1080 = vadd.s32 %v1076, 32
        %v1081 = vadd.s32 %v1076, 40
        %v1082 = vadd.s32 %v1076, 48
        %v1083 = vadd.s32 %v1076, 56
        %v1084 = vadd.s32 %v1076, 64
        %v1085 = vadd.s32 %v1076, 72
        %v1086 = vadd.s32 %v1076, 80
        %v1087 = vadd.s32 %v1076, 88
        %v1088 = vadd.s32 %v1076, 96
        %v1089 = vadd.s32 %v1076, 104
        %v1090 = vadd.s32 %v1076, 112
        %v1091 = vadd.s32 %v1076, 120
        %vm1092 = vcmp.lt.s32.totalorder %v1074, 40
        %vm1093 = vmpackc.low %vm1092, %vm1092
        %v1094 = vsel %vm1093, %v1054, 0
        %v1095 = vsel %vm1093, %v1055, 0
        %v1096 = vsel %vm1093, %v1056, 0
        %vm1097 = vcmp.lt.s32.totalorder %v1076, 40
        %vm1098 = vcmp.lt.s32.totalorder %v1077, 40
        %vm1099 = vcmp.lt.s32.totalorder %v1078, 40
        %vm1100 = vcmp.lt.s32.totalorder %v1079, 40
        %vm1101 = vcmp.lt.s32.totalorder %v1080, 40
        %vm1102 = vcmp.lt.s32.totalorder %v1081, 40
        %vm1103 = vcmp.lt.s32.totalorder %v1082, 40
        %vm1104 = vcmp.lt.s32.totalorder %v1083, 40
        %vm1105 = vcmp.lt.s32.totalorder %v1084, 40
        %vm1106 = vcmp.lt.s32.totalorder %v1085, 40
        %vm1107 = vcmp.lt.s32.totalorder %v1086, 40
        %vm1108 = vcmp.lt.s32.totalorder %v1087, 40
        %vm1109 = vcmp.lt.s32.totalorder %v1088, 40
        %vm1110 = vcmp.lt.s32.totalorder %v1089, 40
        %vm1111 = vcmp.lt.s32.totalorder %v1090, 40
        %vm1112 = vcmp.lt.s32.totalorder %v1091, 40
        %vm1113 = vmpackc.low %vm1097, %vm1097
        %vm1114 = vmpackc.low %vm1098, %vm1098
        %vm1115 = vmpackc.low %vm1099, %vm1099
        %vm1116 = vmpackc.low %vm1100, %vm1100
        %vm1117 = vmpackc.low %vm1101, %vm1101
        %vm1118 = vmpackc.low %vm1102, %vm1102
        %vm1119 = vmpackc.low %vm1103, %vm1103
        %vm1120 = vmpackc.low %vm1104, %vm1104
        %vm1121 = vmpackc.low %vm1105, %vm1105
        %vm1122 = vmpackc.low %vm1106, %vm1106
        %vm1123 = vmpackc.low %vm1107, %vm1107
        %vm1124 = vmpackc.low %vm1108, %vm1108
        %vm1125 = vmpackc.low %vm1109, %vm1109
        %vm1126 = vmpackc.low %vm1110, %vm1110
        %vm1127 = vmpackc.low %vm1111, %vm1111
        %vm1128 = vmpackc.low %vm1112, %vm1112
        %v1129 = vsel %vm1113, %v1057, 0
        %v1130 = vsel %vm1114, %v1058, 0
        %v1131 = vsel %vm1115, %v1059, 0
        %v1132 = vsel %vm1116, %v1060, 0
        %v1133 = vsel %vm1117, %v1061, 0
        %v1134 = vsel %vm1118, %v1062, 0
        %v1135 = vsel %vm1119, %v1063, 0
        %v1136 = vsel %vm1120, %v1064, 0
        %v1137 = vsel %vm1121, %v1065, 0
        %v1138 = vsel %vm1122, %v1066, 0
        %v1139 = vsel %vm1123, %v1067, 0
        %v1140 = vsel %vm1124, %v1068, 0
        %v1141 = vsel %vm1125, %v1069, 0
        %v1142 = vsel %vm1126, %v1070, 0
        %v1143 = vsel %vm1127, %v1071, 0
        %v1144 = vsel %vm1128, %v1072, 0
        %v1145 = vld [vmem:[#allocation3] sm:$0xff]
        %v1146 = vld [vmem:[#allocation3 + $0x8] sm:$0xff]
        %v1147 = vld [vmem:[#allocation3 + $0x10] sm:$0xff]
        %v1151 = vunpack.c.l.b16 %v1094
        %v1152 = vunpack.c.l.b16 %v1095
        %v1153 = vunpack.c.l.b16 %v1096
        %v1154 = vpack.c.b16 %v1152, %v1151
        %v1155 = vpack.c.b16 %v1153, %v1153
        %v1174 = vunpack.c.l.b16 %v1129
        %v1175 = vunpack.c.l.b16 %v1130
        %v1176 = vunpack.c.l.b16 %v1131
        %v1177 = vunpack.c.l.b16 %v1132
        %v1178 = vunpack.c.l.b16 %v1133
        %v1179 = vunpack.c.l.b16 %v1134
        %v1180 = vunpack.c.l.b16 %v1135
        %v1181 = vunpack.c.l.b16 %v1136
        %v1182 = vunpack.c.l.b16 %v1137
        %v1183 = vunpack.c.l.b16 %v1138
        %v1184 = vunpack.c.l.b16 %v1139
        %v1185 = vunpack.c.l.b16 %v1140
        %v1186 = vunpack.c.l.b16 %v1141
        %v1187 = vunpack.c.l.b16 %v1142
        %v1188 = vunpack.c.l.b16 %v1143
        %v1189 = vunpack.c.l.b16 %v1144
        %v1190 = vpack.c.b16 %v1175, %v1174
        %v1191 = vpack.c.b16 %v1177, %v1176
        %v1192 = vpack.c.b16 %v1179, %v1178
        %v1193 = vpack.c.b16 %v1181, %v1180
        %v1194 = vpack.c.b16 %v1183, %v1182
        %v1195 = vpack.c.b16 %v1185, %v1184
        %v1196 = vpack.c.b16 %v1187, %v1186
        %v1197 = vpack.c.b16 %v1189, %v1188
        %1206 = vmatpush.bf16.msra.mxu0 %v1197
        %1207 = vmatpush.bf16.msra.mxu0 %v1196
        %1208 = vmatpush.bf16.msra.mxu0 %v1195
        %1209 = vmatpush.bf16.msra.mxu0 %v1194
        %1210 = vmatpush.bf16.msra.mxu0 %v1193
        %1211 = vmatpush.bf16.msra.mxu0 %v1192
        %1212 = vmatpush.bf16.msra.mxu0 %v1191
        %1213 = vmatpush.bf16.msra.mxu0 %v1190
        %1214 = vmatmul.bf16.gmra.mxu0 %v1154
        %v1215 = vpop.f32.mrf.mxu0
        %v1216 = vadd.f32 0.0, %v1215
        %v1217 = vpop.f32.mrf.mxu0
        %v1218 = vadd.f32 0.0, %v1217
        %1219 = vmatmul.bf16.gmra.mxu0 %v1155
        %v1220 = vpop.f32.mrf.mxu0
        %v1221 = vadd.f32 0.0, %v1220
        %v1222 = vpop.f32.mrf.mxu0
        %1223 = vdwg.mxu0
        %v1224 = vadd.f32 %v1145, %v1216
        %v1225 = vadd.f32 %v1146, %v1218
        %v1226 = vadd.f32 %v1147, %v1221
        %vm1227 = vcmask 261120
        %1228 = vst.msk [vmem:[#allocation3] sm:$0xff] %vm1227, %v1224
        %1229 = vst.msk [vmem:[#allocation3 + $0x8] sm:$0xff] %vm1227, %v1225
        %1230 = vst.msk [vmem:[#allocation3 + $0x10] sm:$0xff] %vm1227, %v1226
        %v1231 = vld [vmem:[#allocation2] sm:$0xff]
        %v1232 = vld [vmem:[#allocation2 + $0x8] sm:$0xff]
        %v1233 = vld [vmem:[#allocation2 + $0x10] sm:$0xff]
        %v1234 = vpack.c.bf16 %v1232, %v1231
        %v1235 = vpack.c.bf16 %v1233, %v1233
        %v1236 = vld [vmem:[%s5] sm:$0xf]
        %v1237 = vld [vmem:[%s5 + $0x4] sm:$0xf]
        %v1238 = vld [vmem:[%s5 + $0x8] sm:$0xf]
        %v1239 = vld [vmem:[%s5 + $0xc] sm:$0xf]
        %v1240 = vld [vmem:[%s6] sm:$0x1]
        %v1242 = vperm.slane %v1240, 0
        %v1248 = vunpack.c.l.b16 %v1236
        %v1249 = vunpack.c.l.b16 %v1237
        %v1250 = vunpack.c.l.b16 %v1238
        %v1251 = vunpack.c.l.b16 %v1239
        %v1252 = vpack.c.b16 %v1249, %v1248
        %v1253 = vpack.c.b16 %v1251, %v1250
        %v1257 = vsel %vm1227, %v1234, 0
        %v1260 = vsel %vm1227, %v1235, 0
        %1262 = vmatpush.bf16.msra.mxu0 0
        %1263 = vmatpush.bf16.msra.mxu0 0
        %1264 = vmatpush.bf16.msra.mxu0 0
        %1265 = vmatpush.bf16.msra.mxu0 0
        %1266 = vmatpush.bf16.msra.mxu0 0
        %1267 = vmatpush.bf16.msra.mxu0 0
        %1268 = vmatpush.bf16.msra.mxu0 %v1253
        %1269 = vmatpush.bf16.msra.mxu0 %v1252
        %1270 = vmatmul.bf16.gmra.mxu0 %v1257
        %v1271 = vpop.f32.mrf.mxu0
        %v1272 = vadd.f32 %v1242, %v1271
        %v1273 = vpop.f32.mrf.mxu0
        %v1274 = vadd.f32 %v1242, %v1273
        %1275 = vmatmul.bf16.gmra.mxu0 %v1260
        %v1276 = vpop.f32.mrf.mxu0
        %v1277 = vadd.f32 %v1242, %v1276
        %v1278 = vpop.f32.mrf.mxu0
        %1279 = vdwg.mxu0
        %vm1280 = vcmp.gt.f32.partialorder %v1272, 0.0
        %vm1281 = vcmp.gt.f32.partialorder %v1274, 0.0
        %vm1282 = vcmp.gt.f32.partialorder %v1277, 0.0
        %v1283 = vmul.f32 %v1272, 0.2
        %v1284 = vmul.f32 %v1274, 0.2
        %v1285 = vmul.f32 %v1277, 0.2
        %v1286 = vsel %vm1280, %v1272, %v1283
        %v1287 = vsel %vm1281, %v1274, %v1284
        %v1288 = vsel %vm1282, %v1277, %v1285
        %v1289 = vld [vmem:[#allocation3] sm:$0xff]
        %v1290 = vld [vmem:[#allocation3 + $0x8] sm:$0xff]
        %v1291 = vld [vmem:[#allocation3 + $0x10] sm:$0xff]
        %v1292 = vpack.c.bf16 %v1290, %v1289
        %v1293 = vpack.c.bf16 %v1291, %v1291
        %v1294 = vld [vmem:[%s7] sm:$0xf]
        %v1295 = vld [vmem:[%s7 + $0x4] sm:$0xf]
        %v1296 = vld [vmem:[%s7 + $0x8] sm:$0xf]
        %v1297 = vld [vmem:[%s7 + $0xc] sm:$0xf]
        %v1298 = vld [vmem:[%s8] sm:$0x1]
        %v1300 = vperm.slane %v1298, 0
        %v1306 = vunpack.c.l.b16 %v1294
        %v1307 = vunpack.c.l.b16 %v1295
        %v1308 = vunpack.c.l.b16 %v1296
        %v1309 = vunpack.c.l.b16 %v1297
        %v1310 = vpack.c.b16 %v1307, %v1306
        %v1311 = vpack.c.b16 %v1309, %v1308
        %v1315 = vsel %vm1227, %v1292, 0
        %v1318 = vsel %vm1227, %v1293, 0
        %1320 = vmatpush.bf16.msra.mxu0 0
        %1321 = vmatpush.bf16.msra.mxu0 0
        %1322 = vmatpush.bf16.msra.mxu0 0
        %1323 = vmatpush.bf16.msra.mxu0 0
        %1324 = vmatpush.bf16.msra.mxu0 0
        %1325 = vmatpush.bf16.msra.mxu0 0
        %1326 = vmatpush.bf16.msra.mxu0 %v1311
        %1327 = vmatpush.bf16.msra.mxu0 %v1310
        %1328 = vmatmul.bf16.gmra.mxu0 %v1315
        %v1329 = vpop.f32.mrf.mxu0
        %v1330 = vadd.f32 %v1300, %v1329
        %v1331 = vpop.f32.mrf.mxu0
        %v1332 = vadd.f32 %v1300, %v1331
        %1333 = vmatmul.bf16.gmra.mxu0 %v1318
        %v1334 = vpop.f32.mrf.mxu0
        %v1335 = vadd.f32 %v1300, %v1334
        %v1336 = vpop.f32.mrf.mxu0
        %1337 = vdwg.mxu0
        %vm1338 = vcmp.gt.f32.partialorder %v1330, 0.0
        %vm1339 = vcmp.gt.f32.partialorder %v1332, 0.0
        %vm1340 = vcmp.gt.f32.partialorder %v1335, 0.0
        %v1341 = vmul.f32 %v1330, 0.2
        %v1342 = vmul.f32 %v1332, 0.2
        %v1343 = vmul.f32 %v1335, 0.2
        %v1344 = vsel %vm1338, %v1330, %v1341
        %v1345 = vsel %vm1339, %v1332, %v1342
        %v1346 = vsel %vm1340, %v1335, %v1343
        %v1347 = vpack.c.bf16 %v1287, %v1286
        %v1348 = vpack.c.bf16 %v1288, %v1288
        %v1349 = vld [vmem:[%s9] sm:$0xf]
        %v1350 = vld [vmem:[%s9 + $0x4] sm:$0xf]
        %v1351 = vld [vmem:[%s9 + $0x8] sm:$0xf]
        %v1352 = vld [vmem:[%s9 + $0xc] sm:$0xf]
        %v1353 = vpack.c.bf16 %v1345, %v1344
        %v1354 = vpack.c.bf16 %v1346, %v1346
        %v1355 = vld [vmem:[%s10] sm:$0xf]
        %v1356 = vld [vmem:[%s10 + $0x4] sm:$0xf]
        %v1357 = vld [vmem:[%s10 + $0x8] sm:$0xf]
        %v1358 = vld [vmem:[%s10 + $0xc] sm:$0xf]
        %v1363 = vunpack.c.l.b16 %v1355
        %v1364 = vunpack.c.l.b16 %v1356
        %v1365 = vunpack.c.l.b16 %v1357
        %v1366 = vunpack.c.l.b16 %v1358
        %v1367 = vpack.c.b16 %v1364, %v1363
        %v1368 = vpack.c.b16 %v1366, %v1365
        %v1372 = vsel %vm1227, %v1353, 0
        %v1375 = vsel %vm1227, %v1354, 0
        %1377 = vmatpush.bf16.msra.mxu0 0
        %1378 = vmatpush.bf16.msra.mxu0 0
        %1379 = vmatpush.bf16.msra.mxu0 0
        %1380 = vmatpush.bf16.msra.mxu0 0
        %1381 = vmatpush.bf16.msra.mxu0 0
        %1382 = vmatpush.bf16.msra.mxu0 0
        %1383 = vmatpush.bf16.msra.mxu0 %v1368
        %1384 = vmatpush.bf16.msra.mxu0 %v1367
        %1385 = vmatmul.bf16.gmra.mxu0 %v1372
        %v1386 = vpop.f32.mrf.mxu0
        %v1387 = vadd.f32 0.0, %v1386
        %v1388 = vpop.f32.mrf.mxu0
        %v1389 = vadd.f32 0.0, %v1388
        %1390 = vmatmul.bf16.gmra.mxu0 %v1375
        %v1391 = vpop.f32.mrf.mxu0
        %v1392 = vadd.f32 0.0, %v1391
        %v1393 = vpop.f32.mrf.mxu0
        %1394 = vdwg.mxu0
        %v1399 = vunpack.c.l.b16 %v1349
        %v1400 = vunpack.c.l.b16 %v1350
        %v1401 = vunpack.c.l.b16 %v1351
        %v1402 = vunpack.c.l.b16 %v1352
        %v1403 = vpack.c.b16 %v1400, %v1399
        %v1404 = vpack.c.b16 %v1402, %v1401
        %v1408 = vsel %vm1227, %v1347, 0
        %v1411 = vsel %vm1227, %v1348, 0
        %1413 = vmatpush.bf16.msra.mxu0 0
        %1414 = vmatpush.bf16.msra.mxu0 0
        %1415 = vmatpush.bf16.msra.mxu0 0
        %1416 = vmatpush.bf16.msra.mxu0 0
        %1417 = vmatpush.bf16.msra.mxu0 0
        %1418 = vmatpush.bf16.msra.mxu0 0
        %1419 = vmatpush.bf16.msra.mxu0 %v1404
        %1420 = vmatpush.bf16.msra.mxu0 %v1403
        %1421 = vmatmul.bf16.gmra.mxu0 %v1408
        %v1422 = vpop.f32.mrf.mxu0
        %v1423 = vadd.f32 %v1387, %v1422
        %v1424 = vpop.f32.mrf.mxu0
        %v1425 = vadd.f32 %v1389, %v1424
        %1426 = vmatmul.bf16.gmra.mxu0 %v1411
        %v1427 = vpop.f32.mrf.mxu0
        %v1428 = vadd.f32 %v1392, %v1427
        %v1429 = vpop.f32.mrf.mxu0
        %1430 = vdwg.mxu0
        %v1431 = vld [vmem:[%s634] sm:$0xf]
        %v1432 = vld [vmem:[%s634 + $0x4] sm:$0xf]
        %v1433 = vld [vmem:[%s634 + $0x8] sm:$0xf]
        %v1434 = vld [vmem:[%s11] sm:$0xf]
        %v1435 = vld [vmem:[%s11 + $0x4] sm:$0xf]
        %v1436 = vld [vmem:[%s11 + $0x8] sm:$0xf]
        %v1437 = vld [vmem:[%s11 + $0xc] sm:$0xf]
        %v1441 = vunpack.c.l.b16 %v1431
        %v1442 = vunpack.c.l.b16 %v1432
        %v1443 = vunpack.c.l.b16 %v1433
        %v1444 = vpack.c.b16 %v1442, %v1441
        %v1445 = vpack.c.b16 %v1443, %v1443
        %v1450 = vunpack.c.l.b16 %v1434
        %v1451 = vunpack.c.l.b16 %v1435
        %v1452 = vunpack.c.l.b16 %v1436
        %v1453 = vunpack.c.l.b16 %v1437
        %v1454 = vpack.c.b16 %v1451, %v1450
        %v1455 = vpack.c.b16 %v1453, %v1452
        %v1459 = vsel %vm1227, %v1444, 0
        %v1462 = vsel %vm1227, %v1445, 0
        %1464 = vmatpush.bf16.msra.mxu0 0
        %1465 = vmatpush.bf16.msra.mxu0 0
        %1466 = vmatpush.bf16.msra.mxu0 0
        %1467 = vmatpush.bf16.msra.mxu0 0
        %1468 = vmatpush.bf16.msra.mxu0 0
        %1469 = vmatpush.bf16.msra.mxu0 0
        %1470 = vmatpush.bf16.msra.mxu0 %v1455
        %1471 = vmatpush.bf16.msra.mxu0 %v1454
        %1472 = vmatmul.bf16.gmra.mxu0 %v1459
        %v1473 = vpop.f32.mrf.mxu0
        %v1474 = vadd.f32 0.0, %v1473
        %v1475 = vpop.f32.mrf.mxu0
        %v1476 = vadd.f32 0.0, %v1475
        %1477 = vmatmul.bf16.gmra.mxu0 %v1462
        %v1478 = vpop.f32.mrf.mxu0
        %v1479 = vadd.f32 0.0, %v1478
        %v1480 = vpop.f32.mrf.mxu0
        %1481 = vdwg.mxu0
        %v1482 = vadd.f32 %v1423, %v1474
        %v1483 = vadd.f32 %v1425, %v1476
        %v1484 = vadd.f32 %v1428, %v1479
        %v1485 = vld [vmem:[%s12] sm:$0x1]
        %v1487 = vperm.slane %v1485, 0
        %v1489 = vadd.f32 %v1482, %v1487
        %v1490 = vadd.f32 %v1483, %v1487
        %v1491 = vadd.f32 %v1484, %v1487
        %vm1492 = vcmp.gt.f32.partialorder %v1489, 0.0
        %vm1493 = vcmp.gt.f32.partialorder %v1490, 0.0
        %vm1494 = vcmp.gt.f32.partialorder %v1491, 0.0
        %v1495 = vmul.f32 %v1489, 0.2
        %v1496 = vmul.f32 %v1490, 0.2
        %v1497 = vmul.f32 %v1491, 0.2
        %v1498 = vsel %vm1492, %v1489, %v1495
        %v1499 = vsel %vm1493, %v1490, %v1496
        %v1500 = vsel %vm1494, %v1491, %v1497
        %1501 = vst.msk [vmem:[%s640] sm:$0xff] %vm1227, %v1498
        %1502 = vst.msk [vmem:[%s640 + $0x8] sm:$0xff] %vm1227, %v1499
        %1503 = vst.msk [vmem:[%s640 + $0x10] sm:$0xff] %vm1227, %v1500
      $region92: #{tpu_custom_call.1} parent=71 // pred_fallthru
        _
      %s1504 = smul.u32 3, %s28
      %p1505 = scmp.lt.s32.totalorder %s1504, 5
      %s1506 = scalar_select %p1505, %s1504, 5
      %s1507 = smul.addr %s1506, 8
      %s1508 = scalar_lea.vmem %s13, %s1507
      // Predicated region
      $region93: #{tpu_custom_call.1} parent=71 // pred_check
        %p1509 = pneg %p372
      $region94: #{tpu_custom_call.1} parent=71 // pred_check_branch
        %1511 = sbr.rel (%p1509) target = $region96
      $region95: #{tpu_custom_call.1} parent=71 // pred_region
        %s1512 = smul.u32 3, %s28
      $region96: #{tpu_custom_call.1} parent=71 // pred_fallthru
        _
    $region72: #{tpu_custom_call.1} parent=5 // pred_fallthru
      _
    %p1513 = scmp.le.s32.totalorder 2, %s19
    // Predicated region
    $region97: #{tpu_custom_call.1} parent=5 // pred_check
      %p1514 = pneg %p1513
    $region98: #{tpu_custom_call.1} parent=5 // pred_check_branch
      %1516 = sbr.rel (%p1514) target = $region100
    $region99: #{tpu_custom_call.1} parent=5 // pred_region
      %s1517 = ssub.s32 %s19, 2
      // Predicated region
      $region101: #{tpu_custom_call.1} parent=99 // pred_check
        %p1518 = pneg %p378
      $region102: #{tpu_custom_call.1} parent=99 // pred_check_branch
        %1520 = sbr.rel (%p1518) target = $region104
      $region103: #{tpu_custom_call.1} parent=99 // pred_region
        %s1521 = smul.u32 3, %s30
        %p1522 = scmp.lt.s32.totalorder %s1521, 5
        %s1523 = scalar_select %p1522, %s1521, 5
        %s1524 = smul.addr %s1523, 8
        %s1525 = scalar_lea.vmem %s13, %s1524
      $region104: #{tpu_custom_call.1} parent=99 // pred_fallthru
        _
    $region100: #{tpu_custom_call.1} parent=5 // pred_fallthru
      _
  $region6: #{tpu_custom_call.1} parent=0 // loop_footer
    %s23 = sadd.s32 1, %s19
  $region7: #{tpu_custom_call.1} parent=0 // loop_footer_branch
    %18 = sbr.rel target = $region3
  $region8: #{tpu_custom_call.1} parent=0 // loop_exit
    _

</llo_original>
